<compile_context>
chip_gen: v5e
topology: v5e:2x2
jax: 0.10.0
libtpu: 0.0.40
codegen_flags: <defaults>
</compile_context>

<pallas_src>
import jax
import jax.numpy as jnp
from jax import lax
from jax.experimental import pallas as pl
from jax.experimental.pallas import tpu as pltpu


def _round_up(x, m):
    return (x + m - 1) // m * m


# ----------------------------------------------------------------------------
# Generation-aware hardware budget
# ----------------------------------------------------------------------------
def _vmem_capacity_bytes():
    try:
        return int(pltpu.get_tpu_info().vmem_capacity_bytes)
    except Exception:
        return 64 * 1024 * 1024          # most conservative (v7x per-TC VMEM)


_VMEM_BYTES = _vmem_capacity_bytes()
_VMEM_CAP = (_VMEM_BYTES * 3) // 4       # leave headroom for compiler scratch
_TM_CAP = 1024 if _VMEM_BYTES >= 96 * 1024 * 1024 else 512


# ----------------------------------------------------------------------------
# Pallas kernels: fused (im2col-matmul) conv + BN shift + LeakyReLU (+ residual)
# Grid = (M tiles, K tiles); K is the reduction axis (innermost, "arbitrary").
# ----------------------------------------------------------------------------
def _conv_kernel(p_ref, w_ref, shift_ref, o_ref, acc_ref):
    k = pl.program_id(1)

    @pl.when(k == 0)
    def _():
        acc_ref[...] = jnp.zeros_like(acc_ref)

    acc_ref[...] += jnp.dot(p_ref[...], w_ref[...],
                            preferred_element_type=jnp.float32)

    @pl.when(k == pl.num_programs(1) - 1)
    def _():
        y = acc_ref[...] + shift_ref[...]
        y = jnp.where(y >= 0.0, y, 0.1 * y)                  # LeakyReLU(0.1)
        o_ref[...] = y.astype(o_ref.dtype)


def _conv_res_kernel(p_ref, w_ref, shift_ref, res_ref, o_ref, acc_ref):
    k = pl.program_id(1)

    @pl.when(k == 0)
    def _():
        acc_ref[...] = jnp.zeros_like(acc_ref)

    acc_ref[...] += jnp.dot(p_ref[...], w_ref[...],
                            preferred_element_type=jnp.float32)

    @pl.when(k == pl.num_programs(1) - 1)
    def _():
        y = acc_ref[...] + shift_ref[...]
        y = jnp.where(y >= 0.0, y, 0.1 * y)                  # LeakyReLU(0.1)
        o_ref[...] = (y + res_ref[...].astype(jnp.float32)).astype(o_ref.dtype)


# ----------------------------------------------------------------------------
# Tiling heuristics
# ----------------------------------------------------------------------------
def _choose_m_tile(M):
    """Prefer an exact divisor of M (no pad/slice copies) giving >=2 grid steps
    (megacore sharding on v7x); fall back to a 128-aligned padded tile."""
    cands = [t for t in (1024, 768, 512, 384, 256, 128, 64, 32, 16, 8)
             if t <= _TM_CAP]
    for t in cands:
        if M % t == 0 and M // t >= 2:
            return t, M
    for t in cands:
        if M % t == 0:
            return t, M
    tm = min(_TM_CAP, _round_up(M, 128))
    return tm, _round_up(M, tm)


def conv_bn_lrelu_matmul(patches, w_scaled, shift, res=None):
    """patches: (M, K) bf16 im2col matrix; w_scaled: (K, Cout) f32 (BN scale
    folded in); shift: (Cout,) f32; res: optional (M, Cout) bf16.
    Returns (M, Cout) bf16."""
    M, K = patches.shape
    Cout = w_scaled.shape[1]

    Cp = _round_up(Cout, 128)                 # lane-dense, unmasked stores
    TM, Mp = _choose_m_tile(M)
    if K > 1024:                              # K-tile: bound resident weights
        TK = 512
        Kp = _round_up(K, TK)
    else:
        TK, Kp = K, K
    nk = Kp // TK

    p = patches.astype(jnp.bfloat16)          # no-op if already bf16
    if Mp != M or Kp != K:
        p = jnp.pad(p, ((0, Mp - M), (0, Kp - K)))
    w = jnp.pad(w_scaled, ((0, Kp - K), (0, Cp - Cout))).astype(jnp.bfloat16)
    sh = jnp.pad(shift.reshape(1, Cout),
                 ((0, 0), (0, Cp - Cout))).astype(jnp.float32)

    in_specs = [
        pl.BlockSpec((TM, TK), lambda i, k: (i, k)),     # patch tile
        pl.BlockSpec((TK, Cp), lambda i, k: (k, 0)),     # weight K-slab
        pl.BlockSpec((1, Cp), lambda i, k: (0, 0)),      # shift (grid-invariant)
    ]
    args = [p, w, sh]
    kernel = _conv_kernel
    res_bytes = 0
    if res is not None:
        r = res.astype(jnp.bfloat16)
        if Mp != M or Cp != Cout:
            r = jnp.pad(r, ((0, Mp - M), (0, Cp - Cout)))
        in_specs.append(pl.BlockSpec((TM, Cp), lambda i, k: (i, 0)))
        args.append(r)
        kernel = _conv_res_kernel
        res_bytes = 2 * TM * Cp * 2           # double-buffered bf16 residual

    # VMEM working set (Pallas double-buffers every pipelined operand).
    est = (2 * TM * TK * 2        # patches, bf16
           + 2 * TK * Cp * 2      # weights, bf16
           + 2 * Cp * 4           # shift
           + res_bytes
           + 2 * TM * Cp * 2      # output, bf16
           + TM * Cp * 4)         # f32 accumulator scratch
    vmem_limit = int(min(_VMEM_CAP, max(2 * est, 32 * 1024 * 1024)))

    out = pl.pallas_call(
        kernel,
        out_shape=jax.ShapeDtypeStruct((Mp, Cp), jnp.bfloat16),
        grid_spec=pltpu.PrefetchScalarGridSpec(
            num_scalar_prefetch=0,
            grid=(Mp // TM, nk),
            in_specs=in_specs,
            out_specs=pl.BlockSpec((TM, Cp), lambda i, k: (i, 0)),
            scratch_shapes=[pltpu.VMEM((TM, Cp), jnp.float32)],
        ),
        compiler_params=pltpu.CompilerParams(
            dimension_semantics=("parallel", "arbitrary"),
            vmem_limit_bytes=vmem_limit,
        ),
    )(*args)
    if Mp != M or Cp != Cout:
        out = out[:M, :Cout]
    return out


# ----------------------------------------------------------------------------
# Glue: padding / im2col (plain JAX, bf16 throughout)
# ----------------------------------------------------------------------------
def _extract_patches(x_nhwc, ksize, stride):
    """x_nhwc already spatially padded. Returns (M, KH*KW*Cin), (N, Ho, Wo)."""
    N, H, W, C = x_nhwc.shape
    Ho = (H - ksize) // stride + 1
    Wo = (W - ksize) // stride + 1
    if ksize == 1 and stride == 1:
        return x_nhwc.reshape(N * Ho * Wo, C), (N, Ho, Wo)
    cols = []
    for kh in range(ksize):
        for kw in range(ksize):
            sl = x_nhwc[:, kh:kh + (Ho - 1) * stride + 1:stride,
                        kw:kw + (Wo - 1) * stride + 1:stride, :]
            cols.append(sl)
    patches = jnp.concatenate(cols, axis=-1)          # (N, Ho, Wo, KH*KW*C)
    return patches.reshape(N * Ho * Wo, ksize * ksize * C), (N, Ho, Wo)


def convolutional_layer(x_nhwc, params, ksize, stride, residual=None):
    """One Darknet `Convolutional` unit (conv -> BN -> LeakyReLU), optional
    fused skip.  Activations are bf16; BN scale folded into the weights."""
    x_nhwc = x_nhwc.astype(jnp.bfloat16)              # bf16 once, before im2col
    pad = ksize // 2
    xp = jnp.pad(x_nhwc, ((0, 0), (pad, pad), (pad, pad), (0, 0))) if pad else x_nhwc
    patches, (N, Ho, Wo) = _extract_patches(xp, ksize, stride)

    w = params["w"]                                   # (KH, KW, Cin, Cout)
    Cout = w.shape[-1]

    # Fold BN (inference) into the conv: scale -> weights, shift -> epilogue.
    eps = 1e-5
    scale = params["gamma"] / jnp.sqrt(params["var"] + eps)      # (Cout,)
    shift = params["beta"] - params["mean"] * scale              # (Cout,)
    w_scaled = w.reshape(-1, Cout) * scale[None, :]              # f32

    res_mat = None
    if residual is not None:
        res_mat = residual.astype(jnp.bfloat16).reshape(N * Ho * Wo, Cout)

    out = conv_bn_lrelu_matmul(patches, w_scaled, shift.astype(jnp.float32),
                               res_mat)
    return out.reshape(N, Ho, Wo, Cout)


# ----------------------------------------------------------------------------
# Parameter construction (deterministic, synthetic)
# ----------------------------------------------------------------------------
def _make_conv_params(key, ksize, cin, cout):
    w = 0.05 * jax.random.normal(key, (ksize, ksize, cin, cout), jnp.float32)
    return {
        "w": w,
        "gamma": jnp.ones((cout,), jnp.float32),
        "beta": jnp.zeros((cout,), jnp.float32),
        "mean": jnp.zeros((cout,), jnp.float32),
        "var": jnp.ones((cout,), jnp.float32),
    }


def make_residual_block_params(key, repeat, in_channels, out_channels):
    keys = jax.random.split(key, 1 + 2 * repeat)
    params = {"down": _make_conv_params(keys[0], 3, in_channels, out_channels),
              "residuals": []}
    half = out_channels // 2
    for r in range(repeat):
        params["residuals"].append({
            "c1": _make_conv_params(keys[1 + 2 * r], 1, out_channels, half),
            "c2": _make_conv_params(keys[2 + 2 * r], 3, half, out_channels),
        })
    return params


# ----------------------------------------------------------------------------
# Full ResidualBlock forward
# ----------------------------------------------------------------------------
@jax.jit
def residual_block_forward(x_nchw, params):
    # convert NCHW (PyTorch) -> NHWC (kernel layout), bf16 activation flow
    x = jnp.transpose(x_nchw, (0, 2, 3, 1)).astype(jnp.bfloat16)
    # downsample conv: 3x3, stride 2, pad 1
    x = convolutional_layer(x, params["down"], ksize=3, stride=2)
    # repeated Residual layers
    for rp in params["residuals"]:
        res = x
        h = convolutional_layer(x, rp["c1"], ksize=1, stride=1)
        x = convolutional_layer(h, rp["c2"], ksize=3, stride=1, residual=res)
    # back to NCHW, f32 like the PyTorch module
    return jnp.transpose(x, (0, 3, 1, 2)).astype(jnp.float32)


# ----------------------------------------------------------------------------
# Pure-JAX reference (silent correctness check)
# ----------------------------------------------------------------------------
def _ref_conv_unit(x, p, ksize, stride):
    y = lax.conv_general_dilated(
        x, p["w"], window_strides=(stride, stride),
        padding=[(ksize // 2, ksize // 2)] * 2,
        dimension_numbers=("NHWC", "HWIO", "NHWC"))
    scale = p["gamma"] / jnp.sqrt(p["var"] + 1e-5)
    shift = p["beta"] - p["mean"] * scale
    y = y * scale + shift
    return jnp.where(y >= 0.0, y, 0.1 * y)


def _ref_forward(x_nchw, params):
    x = jnp.transpose(x_nchw, (0, 2, 3, 1)).astype(jnp.float32)
    x = _ref_conv_unit(x, params["down"], 3, 2)
    for rp in params["residuals"]:
        res = x
        h = _ref_conv_unit(x, rp["c1"], 1, 1)
        x = _ref_conv_unit(h, rp["c2"], 3, 1) + res
    return jnp.transpose(x, (0, 3, 1, 2))


if __name__ == "__main__":
    key = jax.random.PRNGKey(0)
    k_x, k_p = jax.random.split(key)

    repeat, in_channels, out_channels = 2, 4, 8
    x = jax.random.normal(k_x, (2, in_channels, 16, 16), jnp.float32)   # NCHW
    params = make_residual_block_params(k_p, repeat, in_channels, out_channels)

    out = residual_block_forward(x, params)
    out = jax.block_until_ready(out)

    ref = jax.block_until_ready(_ref_forward(x, params))
    assert out.shape == (2, out_channels, 8, 8), out.shape
    # bf16 matmul operands + bf16 inter-layer activations (f32 accumulation)
    # -> relaxed tolerance vs the f32 reference.
    assert jnp.allclose(out, ref, atol=3e-2, rtol=3e-2), "mismatch vs JAX reference"

    print("KERNEL_OK")
</pallas_src>

<mosaic_0001>
module attributes {stable_mosaic.version = 11 : i64} {
  func.func @_conv_kernel(%arg0: i32, %arg1: i32, %arg2: memref<64x36xbf16, #tpu.memory_space<vmem>>, %arg3: memref<36x128xbf16, #tpu.memory_space<vmem>>, %arg4: memref<1x128xf32, #tpu.memory_space<vmem>>, %arg5: memref<64x128xbf16, #tpu.memory_space<vmem>>, %arg6: memref<64x128xf32, #tpu.memory_space<vmem>>) attributes {dimension_semantics = [#tpu.dimension_semantics<parallel>, #tpu.dimension_semantics<arbitrary>], iteration_bounds = array<i64: 2, 1>, scalar_prefetch = 0 : i64, scratch_operands = 1 : i64, tpu.core_type = #tpu.core_type<tc>, window_params = [{transform_indices = @transform_0, window_bounds = array<i64: 64, 36>}, {transform_indices = @transform_1, window_bounds = array<i64: 36, 128>}, {pipeline_mode = #tpu.pipeline_mode<synchronous>, transform_indices = @transform_2, window_bounds = array<i64: 1, 128>}, {transform_indices = @transform_3, window_bounds = array<i64: 64, 128>}]} {
    %c0_i32 = arith.constant 0 : i32
    %0 = arith.cmpi eq, %arg1, %c0_i32 : i32
    %1 = arith.extui %0 : i1 to i32
    %c0_i32_0 = arith.constant 0 : i32
    %2 = arith.cmpi ne, %1, %c0_i32_0 : i32
    scf.if %2 {
      %cst_10 = arith.constant 0.000000e+00 : f32
      %12 = vector.broadcast %cst_10 : f32 to vector<64x128xf32>
      %c0_11 = arith.constant 0 : index
      %c0_12 = arith.constant 0 : index
      %13 = vector.load %arg6[%c0_11, %c0_12] : memref<64x128xf32, #tpu.memory_space<vmem>>, vector<64x128xf32>
      tpu.vector_store %arg6[%c0_11, %c0_12], %12 {strides = array<i32>} : memref<64x128xf32, #tpu.memory_space<vmem>>, vector<64x128xf32>,
    } else {
    }
    %c0 = arith.constant 0 : index
    %c0_1 = arith.constant 0 : index
    %3 = vector.load %arg6[%c0, %c0_1] : memref<64x128xf32, #tpu.memory_space<vmem>>, vector<64x128xf32>
    %c0_2 = arith.constant 0 : index
    %c0_3 = arith.constant 0 : index
    %4 = vector.load %arg2[%c0_2, %c0_3] : memref<64x36xbf16, #tpu.memory_space<vmem>>, vector<64x36xbf16>
    %c0_4 = arith.constant 0 : index
    %c0_5 = arith.constant 0 : index
    %5 = vector.load %arg3[%c0_4, %c0_5] : memref<36x128xbf16, #tpu.memory_space<vmem>>, vector<36x128xbf16>
    %cst = arith.constant dense<0.000000e+00> : vector<64x128xf32>
    %6 = tpu.matmul %4, %5, %cst {dimension_numbers = #tpu.dot_dimension_numbers<[1], [0], [0], [1], [0, 0, 1, 1], [], []>} : vector<64x36xbf16>, vector<36x128xbf16>, vector<64x128xf32> -> vector<64x128xf32>
    %7 = arith.addf %3, %6 : vector<64x128xf32>
    %c0_6 = arith.constant 0 : index
    %c0_7 = arith.constant 0 : index
    %8 = vector.load %arg6[%c0_6, %c0_7] : memref<64x128xf32, #tpu.memory_space<vmem>>, vector<64x128xf32>
    tpu.vector_store %arg6[%c0_6, %c0_7], %7 {strides = array<i32>} : memref<64x128xf32, #tpu.memory_space<vmem>>, vector<64x128xf32>,
    %c0_i32_8 = arith.constant 0 : i32
    %9 = arith.cmpi eq, %arg1, %c0_i32_8 : i32
    %10 = arith.extui %9 : i1 to i32
    %c0_i32_9 = arith.constant 0 : i32
    %11 = arith.cmpi ne, %10, %c0_i32_9 : i32
    scf.if %11 {
      %c0_10 = arith.constant 0 : index
      %c0_11 = arith.constant 0 : index
      %12 = vector.load %arg6[%c0_10, %c0_11] : memref<64x128xf32, #tpu.memory_space<vmem>>, vector<64x128xf32>
      %c0_12 = arith.constant 0 : index
      %c0_13 = arith.constant 0 : index
      %13 = vector.load %arg4[%c0_12, %c0_13] : memref<1x128xf32, #tpu.memory_space<vmem>>, vector<1x128xf32>
      %14 = vector.broadcast %13 : vector<1x128xf32> to vector<64x128xf32>
      %15 = arith.addf %12, %14 : vector<64x128xf32>
      %cst_14 = arith.constant 0.000000e+00 : f32
      %16 = vector.broadcast %cst_14 : f32 to vector<64x128xf32>
      %17 = arith.cmpf oge, %15, %16 : vector<64x128xf32>
      %cst_15 = arith.constant 1.000000e-01 : f32
      %18 = vector.broadcast %cst_15 : f32 to vector<64x128xf32>
      %19 = arith.mulf %18, %15 : vector<64x128xf32>
      %20 = arith.select %17, %15, %19 : vector<64x128xi1>, vector<64x128xf32>
      %21 = arith.truncf %20 : vector<64x128xf32> to vector<64x128xbf16>
      %c0_16 = arith.constant 0 : index
      %c0_17 = arith.constant 0 : index
      %22 = vector.load %arg5[%c0_16, %c0_17] : memref<64x128xbf16, #tpu.memory_space<vmem>>, vector<64x128xbf16>
      tpu.vector_store %arg5[%c0_16, %c0_17], %21 {strides = array<i32>} : memref<64x128xbf16, #tpu.memory_space<vmem>>, vector<64x128xbf16>,
    } else {
    }
    return
  }
  func.func @transform_0(%arg0: i32, %arg1: i32) -> (i32, i32) {
    %c0_i32 = arith.constant 0 : i32
    return %arg0, %arg1 : i32, i32
  }
  func.func @transform_1(%arg0: i32, %arg1: i32) -> (i32, i32) {
    %c0_i32 = arith.constant 0 : i32
    %c0_i32_0 = arith.constant 0 : i32
    return %arg1, %c0_i32 : i32, i32
  }
  func.func @transform_2(%arg0: i32, %arg1: i32) -> (i32, i32) {
    %c0_i32 = arith.constant 0 : i32
    %c0_i32_0 = arith.constant 0 : i32
    %c0_i32_1 = arith.constant 0 : i32
    return %c0_i32, %c0_i32_0 : i32, i32
  }
  func.func @transform_3(%arg0: i32, %arg1: i32) -> (i32, i32) {
    %c0_i32 = arith.constant 0 : i32
    %c0_i32_0 = arith.constant 0 : i32
    return %arg0, %c0_i32 : i32, i32
  }
}

module attributes {stable_mosaic.version = 11 : i64} {
  func.func @_conv_kernel(%arg0: i32, %arg1: i32, %arg2: memref<64x8xbf16, #tpu.memory_space<vmem>>, %arg3: memref<8x128xbf16, #tpu.memory_space<vmem>>, %arg4: memref<1x128xf32, #tpu.memory_space<vmem>>, %arg5: memref<64x128xbf16, #tpu.memory_space<vmem>>, %arg6: memref<64x128xf32, #tpu.memory_space<vmem>>) attributes {dimension_semantics = [#tpu.dimension_semantics<parallel>, #tpu.dimension_semantics<arbitrary>], iteration_bounds = array<i64: 2, 1>, scalar_prefetch = 0 : i64, scratch_operands = 1 : i64, tpu.core_type = #tpu.core_type<tc>, window_params = [{transform_indices = @transform_0, window_bounds = array<i64: 64, 8>}, {transform_indices = @transform_1, window_bounds = array<i64: 8, 128>}, {pipeline_mode = #tpu.pipeline_mode<synchronous>, transform_indices = @transform_2, window_bounds = array<i64: 1, 128>}, {transform_indices = @transform_3, window_bounds = array<i64: 64, 128>}]} {
    %c0_i32 = arith.constant 0 : i32
    %0 = arith.cmpi eq, %arg1, %c0_i32 : i32
    %1 = arith.extui %0 : i1 to i32
    %c0_i32_0 = arith.constant 0 : i32
    %2 = arith.cmpi ne, %1, %c0_i32_0 : i32
    scf.if %2 {
      %cst_10 = arith.constant 0.000000e+00 : f32
      %12 = vector.broadcast %cst_10 : f32 to vector<64x128xf32>
      %c0_11 = arith.constant 0 : index
      %c0_12 = arith.constant 0 : index
      %13 = vector.load %arg6[%c0_11, %c0_12] : memref<64x128xf32, #tpu.memory_space<vmem>>, vector<64x128xf32>
      tpu.vector_store %arg6[%c0_11, %c0_12], %12 {strides = array<i32>} : memref<64x128xf32, #tpu.memory_space<vmem>>, vector<64x128xf32>,
    } else {
    }
    %c0 = arith.constant 0 : index
    %c0_1 = arith.constant 0 : index
    %3 = vector.load %arg6[%c0, %c0_1] : memref<64x128xf32, #tpu.memory_space<vmem>>, vector<64x128xf32>
    %c0_2 = arith.constant 0 : index
    %c0_3 = arith.constant 0 : index
    %4 = vector.load %arg2[%c0_2, %c0_3] : memref<64x8xbf16, #tpu.memory_space<vmem>>, vector<64x8xbf16>
    %c0_4 = arith.constant 0 : index
    %c0_5 = arith.constant 0 : index
    %5 = vector.load %arg3[%c0_4, %c0_5] : memref<8x128xbf16, #tpu.memory_space<vmem>>, vector<8x128xbf16>
    %cst = arith.constant dense<0.000000e+00> : vector<64x128xf32>
    %6 = tpu.matmul %4, %5, %cst {dimension_numbers = #tpu.dot_dimension_numbers<[1], [0], [0], [1], [0, 0, 1, 1], [], []>} : vector<64x8xbf16>, vector<8x128xbf16>, vector<64x128xf32> -> vector<64x128xf32>
    %7 = arith.addf %3, %6 : vector<64x128xf32>
    %c0_6 = arith.constant 0 : index
    %c0_7 = arith.constant 0 : index
    %8 = vector.load %arg6[%c0_6, %c0_7] : memref<64x128xf32, #tpu.memory_space<vmem>>, vector<64x128xf32>
    tpu.vector_store %arg6[%c0_6, %c0_7], %7 {strides = array<i32>} : memref<64x128xf32, #tpu.memory_space<vmem>>, vector<64x128xf32>,
    %c0_i32_8 = arith.constant 0 : i32
    %9 = arith.cmpi eq, %arg1, %c0_i32_8 : i32
    %10 = arith.extui %9 : i1 to i32
    %c0_i32_9 = arith.constant 0 : i32
    %11 = arith.cmpi ne, %10, %c0_i32_9 : i32
    scf.if %11 {
      %c0_10 = arith.constant 0 : index
      %c0_11 = arith.constant 0 : index
      %12 = vector.load %arg6[%c0_10, %c0_11] : memref<64x128xf32, #tpu.memory_space<vmem>>, vector<64x128xf32>
      %c0_12 = arith.constant 0 : index
      %c0_13 = arith.constant 0 : index
      %13 = vector.load %arg4[%c0_12, %c0_13] : memref<1x128xf32, #tpu.memory_space<vmem>>, vector<1x128xf32>
      %14 = vector.broadcast %13 : vector<1x128xf32> to vector<64x128xf32>
      %15 = arith.addf %12, %14 : vector<64x128xf32>
      %cst_14 = arith.constant 0.000000e+00 : f32
      %16 = vector.broadcast %cst_14 : f32 to vector<64x128xf32>
      %17 = arith.cmpf oge, %15, %16 : vector<64x128xf32>
      %cst_15 = arith.constant 1.000000e-01 : f32
      %18 = vector.broadcast %cst_15 : f32 to vector<64x128xf32>
      %19 = arith.mulf %18, %15 : vector<64x128xf32>
      %20 = arith.select %17, %15, %19 : vector<64x128xi1>, vector<64x128xf32>
      %21 = arith.truncf %20 : vector<64x128xf32> to vector<64x128xbf16>
      %c0_16 = arith.constant 0 : index
      %c0_17 = arith.constant 0 : index
      %22 = vector.load %arg5[%c0_16, %c0_17] : memref<64x128xbf16, #tpu.memory_space<vmem>>, vector<64x128xbf16>
      tpu.vector_store %arg5[%c0_16, %c0_17], %21 {strides = array<i32>} : memref<64x128xbf16, #tpu.memory_space<vmem>>, vector<64x128xbf16>,
    } else {
    }
    return
  }
  func.func @transform_0(%arg0: i32, %arg1: i32) -> (i32, i32) {
    %c0_i32 = arith.constant 0 : i32
    return %arg0, %arg1 : i32, i32
  }
  func.func @transform_1(%arg0: i32, %arg1: i32) -> (i32, i32) {
    %c0_i32 = arith.constant 0 : i32
    %c0_i32_0 = arith.constant 0 : i32
    return %arg1, %c0_i32 : i32, i32
  }
  func.func @transform_2(%arg0: i32, %arg1: i32) -> (i32, i32) {
    %c0_i32 = arith.constant 0 : i32
    %c0_i32_0 = arith.constant 0 : i32
    %c0_i32_1 = arith.constant 0 : i32
    return %c0_i32, %c0_i32_0 : i32, i32
  }
  func.func @transform_3(%arg0: i32, %arg1: i32) -> (i32, i32) {
    %c0_i32 = arith.constant 0 : i32
    %c0_i32_0 = arith.constant 0 : i32
    return %arg0, %c0_i32 : i32, i32
  }
}

module attributes {stable_mosaic.version = 11 : i64} {
  func.func @_conv_res_kernel(%arg0: i32, %arg1: i32, %arg2: memref<64x36xbf16, #tpu.memory_space<vmem>>, %arg3: memref<36x128xbf16, #tpu.memory_space<vmem>>, %arg4: memref<1x128xf32, #tpu.memory_space<vmem>>, %arg5: memref<64x128xbf16, #tpu.memory_space<vmem>>, %arg6: memref<64x128xbf16, #tpu.memory_space<vmem>>, %arg7: memref<64x128xf32, #tpu.memory_space<vmem>>) attributes {dimension_semantics = [#tpu.dimension_semantics<parallel>, #tpu.dimension_semantics<arbitrary>], iteration_bounds = array<i64: 2, 1>, scalar_prefetch = 0 : i64, scratch_operands = 1 : i64, tpu.core_type = #tpu.core_type<tc>, window_params = [{transform_indices = @transform_0, window_bounds = array<i64: 64, 36>}, {transform_indices = @transform_1, window_bounds = array<i64: 36, 128>}, {pipeline_mode = #tpu.pipeline_mode<synchronous>, transform_indices = @transform_2, window_bounds = array<i64: 1, 128>}, {transform_indices = @transform_3, window_bounds = array<i64: 64, 128>}, {transform_indices = @transform_4, window_bounds = array<i64: 64, 128>}]} {
    %c0_i32 = arith.constant 0 : i32
    %0 = arith.cmpi eq, %arg1, %c0_i32 : i32
    %1 = arith.extui %0 : i1 to i32
    %c0_i32_0 = arith.constant 0 : i32
    %2 = arith.cmpi ne, %1, %c0_i32_0 : i32
    scf.if %2 {
      %cst_10 = arith.constant 0.000000e+00 : f32
      %12 = vector.broadcast %cst_10 : f32 to vector<64x128xf32>
      %c0_11 = arith.constant 0 : index
      %c0_12 = arith.constant 0 : index
      %13 = vector.load %arg7[%c0_11, %c0_12] : memref<64x128xf32, #tpu.memory_space<vmem>>, vector<64x128xf32>
      tpu.vector_store %arg7[%c0_11, %c0_12], %12 {strides = array<i32>} : memref<64x128xf32, #tpu.memory_space<vmem>>, vector<64x128xf32>,
    } else {
    }
    %c0 = arith.constant 0 : index
    %c0_1 = arith.constant 0 : index
    %3 = vector.load %arg7[%c0, %c0_1] : memref<64x128xf32, #tpu.memory_space<vmem>>, vector<64x128xf32>
    %c0_2 = arith.constant 0 : index
    %c0_3 = arith.constant 0 : index
    %4 = vector.load %arg2[%c0_2, %c0_3] : memref<64x36xbf16, #tpu.memory_space<vmem>>, vector<64x36xbf16>
    %c0_4 = arith.constant 0 : index
    %c0_5 = arith.constant 0 : index
    %5 = vector.load %arg3[%c0_4, %c0_5] : memref<36x128xbf16, #tpu.memory_space<vmem>>, vector<36x128xbf16>
    %cst = arith.constant dense<0.000000e+00> : vector<64x128xf32>
    %6 = tpu.matmul %4, %5, %cst {dimension_numbers = #tpu.dot_dimension_numbers<[1], [0], [0], [1], [0, 0, 1, 1], [], []>} : vector<64x36xbf16>, vector<36x128xbf16>, vector<64x128xf32> -> vector<64x128xf32>
    %7 = arith.addf %3, %6 : vector<64x128xf32>
    %c0_6 = arith.constant 0 : index
    %c0_7 = arith.constant 0 : index
    %8 = vector.load %arg7[%c0_6, %c0_7] : memref<64x128xf32, #tpu.memory_space<vmem>>, vector<64x128xf32>
    tpu.vector_store %arg7[%c0_6, %c0_7], %7 {strides = array<i32>} : memref<64x128xf32, #tpu.memory_space<vmem>>, vector<64x128xf32>,
    %c0_i32_8 = arith.constant 0 : i32
    %9 = arith.cmpi eq, %arg1, %c0_i32_8 : i32
    %10 = arith.extui %9 : i1 to i32
    %c0_i32_9 = arith.constant 0 : i32
    %11 = arith.cmpi ne, %10, %c0_i32_9 : i32
    scf.if %11 {
      %c0_10 = arith.constant 0 : index
      %c0_11 = arith.constant 0 : index
      %12 = vector.load %arg7[%c0_10, %c0_11] : memref<64x128xf32, #tpu.memory_space<vmem>>, vector<64x128xf32>
      %c0_12 = arith.constant 0 : index
      %c0_13 = arith.constant 0 : index
      %13 = vector.load %arg4[%c0_12, %c0_13] : memref<1x128xf32, #tpu.memory_space<vmem>>, vector<1x128xf32>
      %14 = vector.broadcast %13 : vector<1x128xf32> to vector<64x128xf32>
      %15 = arith.addf %12, %14 : vector<64x128xf32>
      %cst_14 = arith.constant 0.000000e+00 : f32
      %16 = vector.broadcast %cst_14 : f32 to vector<64x128xf32>
      %17 = arith.cmpf oge, %15, %16 : vector<64x128xf32>
      %cst_15 = arith.constant 1.000000e-01 : f32
      %18 = vector.broadcast %cst_15 : f32 to vector<64x128xf32>
      %19 = arith.mulf %18, %15 : vector<64x128xf32>
      %20 = arith.select %17, %15, %19 : vector<64x128xi1>, vector<64x128xf32>
      %c0_16 = arith.constant 0 : index
      %c0_17 = arith.constant 0 : index
      %21 = vector.load %arg5[%c0_16, %c0_17] : memref<64x128xbf16, #tpu.memory_space<vmem>>, vector<64x128xbf16>
      %22 = arith.extf %21 : vector<64x128xbf16> to vector<64x128xf32>
      %23 = arith.addf %20, %22 : vector<64x128xf32>
      %24 = arith.truncf %23 : vector<64x128xf32> to vector<64x128xbf16>
      %c0_18 = arith.constant 0 : index
      %c0_19 = arith.constant 0 : index
      %25 = vector.load %arg6[%c0_18, %c0_19] : memref<64x128xbf16, #tpu.memory_space<vmem>>, vector<64x128xbf16>
      tpu.vector_store %arg6[%c0_18, %c0_19], %24 {strides = array<i32>} : memref<64x128xbf16, #tpu.memory_space<vmem>>, vector<64x128xbf16>,
    } else {
    }
    return
  }
  func.func @transform_0(%arg0: i32, %arg1: i32) -> (i32, i32) {
    %c0_i32 = arith.constant 0 : i32
    return %arg0, %arg1 : i32, i32
  }
  func.func @transform_1(%arg0: i32, %arg1: i32) -> (i32, i32) {
    %c0_i32 = arith.constant 0 : i32
    %c0_i32_0 = arith.constant 0 : i32
    return %arg1, %c0_i32 : i32, i32
  }
  func.func @transform_2(%arg0: i32, %arg1: i32) -> (i32, i32) {
    %c0_i32 = arith.constant 0 : i32
    %c0_i32_0 = arith.constant 0 : i32
    %c0_i32_1 = arith.constant 0 : i32
    return %c0_i32, %c0_i32_0 : i32, i32
  }
  func.func @transform_3(%arg0: i32, %arg1: i32) -> (i32, i32) {
    %c0_i32 = arith.constant 0 : i32
    %c0_i32_0 = arith.constant 0 : i32
    return %arg0, %c0_i32 : i32, i32
  }
  func.func @transform_4(%arg0: i32, %arg1: i32) -> (i32, i32) {
    %c0_i32 = arith.constant 0 : i32
    %c0_i32_0 = arith.constant 0 : i32
    return %arg0, %c0_i32 : i32, i32
  }
}

</mosaic_0001>

<llo_original>
// kernel: residual_block_forward.5
$region0: #{residual_block_forward.5}
  #allocation0 [shape = 'u32[]', space=smem, size = 0x4, offset = 0x4, fixed_abs, tag = 'smem constant byte address 0x4 - core index']
  #allocation1 [shape = 'u32[72,128]{1,0:T(1,128)}', space=vmem, size = 0x9000, scoped, tag = 'internal scratch']
  #allocation2 [shape = 'f32[64,128]{1,0:T(8,128)}', space=vmem, size = 0x8000, scoped, tag = 'scratch operand']
  %s0 = inlined_call_operand.vmem [shape: bf16[128,36], index: 0, kind: input, shape index: {}]
  %s1 = inlined_call_operand.vmem [shape: bf16[36,128], index: 1, kind: input, shape index: {}]
  %s2 = inlined_call_operand.vmem [shape: f32[1,128], index: 2, kind: input, shape index: {}]
  %s3 = inlined_call_operand.vmem [shape: bf16[128,128], index: 3, kind: output, shape index: {}]
  %s4 = sld [smem:[#allocation0]]
  $region53: #{residual_block_forward.5} parent=0
    _
  %s6 = ssub.s32 1, %s4
  %s7 = scalar_select 0, %s6, %s4
  loop: start=0, step=1, limit=4
  $region2: #{residual_block_forward.5} parent=0 // loop_pre_header
    _
  $region3: #{residual_block_forward.5} parent=0 // loop_header
    %s9 = sphi 0, %s13
    %p10 = scmp.ge.s32.totalorder %s9, 4
    %s16 = sphi 0, %s28
    %s17 = sphi 0, %s24
    %s18 = sphi 0, %s16
    %s19 = sphi 0, %s17
    %s20 = sphi 0, %s18
    %s21 = sphi 0, %s19
    %s33 = sphi 0, %s35
    %s36 = sphi 0, %s33
    %s37 = sphi 0, %s36
    %s53 = sphi 0, %s37
    %s59 = sphi 0, %s61
    %s62 = sphi 0, %s59
    %s63 = sphi 0, %s62
    %s79 = sphi 0, %s63
    %s83 = sphi 0, %s83
    %s85 = sphi 0, %s83
    %s86 = sphi 0, %s85
    %s100 = sphi 0, %s86
    %s106 = sphi 0, %s108
    %s109 = sphi 0, %s106
    %s110 = sphi 0, %s109
    %s126 = sphi 0, %s110
  $region4: #{residual_block_forward.5} parent=0 // loop_header_branch
    %12 = sbr.rel (%p10) target = $region8
  $region5: #{residual_block_forward.5} parent=0 // loop_body
    %s14 = ssub.s32 %s9, 1
    %s15 = ssub.s32 %s9, 2
    %s22 = sadd.s32 1, %s17
    %p23 = scmp.ge.s32.totalorder %s22, 1
    %s24 = scalar_select %p23, 0, %s22
    %s25 = sadd.s32 1, %s16
    %s26 = scalar_select %p23, %s25, %s16
    %p27 = scmp.ge.s32.totalorder %s26, 2
    %s28 = scalar_select %p27, 0, %s26
    %s29 = ssub.s32 %s16, %s28
    %s30 = ssub.s32 %s17, %s24
    %s31 = sor.u32 %s29, %s30
    %p32 = scmp.eq.s32.totalorder %s31, 0
    %s34 = sadd.s32 %s33, 1
    %s35 = scalar_select %p32, %s33, %s34
    %p38 = pneg %p32
    %p39 = scmp.eq.s32.totalorder %s9, 1
    %p40 = por %p38, %p39
    %p41 = scmp.ne.s32.totalorder %s33, %s36
    %p42 = scmp.eq.s32.totalorder %s9, 0
    %p43 = por %p41, %p42
    %p44 = scmp.ne.s32.totalorder %s33, %s36
    %p45 = scmp.eq.s32.totalorder %s14, 1
    %p46 = por %p44, %p45
    %p47 = scmp.ne.s32.totalorder %s36, %s37
    %p48 = scmp.eq.s32.totalorder %s14, 0
    %p49 = por %p47, %p48
    %p50 = scmp.ne.s32.totalorder %s36, %s37
    %p51 = scmp.eq.s32.totalorder %s15, 1
    %p52 = por %p50, %p51
    %p54 = scmp.ne.s32.totalorder %s37, %s53
    %p55 = scmp.eq.s32.totalorder %s15, 0
    %p56 = por %p54, %p55
    %s57 = ssub.s32 %s17, %s24
    %p58 = scmp.eq.s32.totalorder %s57, 0
    %s60 = sadd.s32 %s59, 1
    %s61 = scalar_select %p58, %s59, %s60
    %p64 = pneg %p58
    %p65 = scmp.eq.s32.totalorder %s9, 1
    %p66 = por %p64, %p65
    %p67 = scmp.ne.s32.totalorder %s59, %s62
    %p68 = scmp.eq.s32.totalorder %s9, 0
    %p69 = por %p67, %p68
    %p70 = scmp.ne.s32.totalorder %s59, %s62
    %p71 = scmp.eq.s32.totalorder %s14, 1
    %p72 = por %p70, %p71
    %p73 = scmp.ne.s32.totalorder %s62, %s63
    %p74 = scmp.eq.s32.totalorder %s14, 0
    %p75 = por %p73, %p74
    %p76 = scmp.ne.s32.totalorder %s62, %s63
    %p77 = scmp.eq.s32.totalorder %s15, 1
    %p78 = por %p76, %p77
    %p80 = scmp.ne.s32.totalorder %s63, %s79
    %p81 = scmp.eq.s32.totalorder %s15, 0
    %p82 = por %p80, %p81
    %s84 = sadd.s32 %s83, 1
    %p87 = scmp.eq.s32.totalorder %s9, 1
    %p88 = scmp.ne.s32.totalorder %s83, %s85
    %p89 = scmp.eq.s32.totalorder %s9, 0
    %p90 = por %p88, %p89
    %p91 = scmp.ne.s32.totalorder %s83, %s85
    %p92 = scmp.eq.s32.totalorder %s14, 1
    %p93 = por %p91, %p92
    %p94 = scmp.ne.s32.totalorder %s85, %s86
    %p95 = scmp.eq.s32.totalorder %s14, 0
    %p96 = por %p94, %p95
    %p97 = scmp.ne.s32.totalorder %s85, %s86
    %p98 = scmp.eq.s32.totalorder %s15, 1
    %p99 = por %p97, %p98
    %p101 = scmp.ne.s32.totalorder %s86, %s100
    %p102 = scmp.eq.s32.totalorder %s15, 0
    %p103 = por %p101, %p102
    %s104 = ssub.s32 %s16, %s28
    %p105 = scmp.eq.s32.totalorder %s104, 0
    %s107 = sadd.s32 %s106, 1
    %s108 = scalar_select %p105, %s106, %s107
    %p111 = pneg %p105
    %p112 = scmp.eq.s32.totalorder %s9, 1
    %p113 = por %p111, %p112
    %p114 = scmp.ne.s32.totalorder %s106, %s109
    %p115 = scmp.eq.s32.totalorder %s9, 0
    %p116 = por %p114, %p115
    %p117 = scmp.ne.s32.totalorder %s106, %s109
    %p118 = scmp.eq.s32.totalorder %s14, 1
    %p119 = por %p117, %p118
    %p120 = scmp.ne.s32.totalorder %s109, %s110
    %p121 = scmp.eq.s32.totalorder %s14, 0
    %p122 = por %p120, %p121
    %p123 = scmp.ne.s32.totalorder %s109, %s110
    %p124 = scmp.eq.s32.totalorder %s15, 1
    %p125 = por %p123, %p124
    %p127 = scmp.ne.s32.totalorder %s110, %s126
    %p128 = scmp.eq.s32.totalorder %s15, 0
    %p129 = por %p127, %p128
    %p130 = scmp.le.s32.totalorder 1, %s9
    %p131 = scmp.lt.s32.totalorder %s9, 3
    %p132 = pnand %p130, %p131
    %p133 = pneg %p132
    // Predicated region
    $region9: #{residual_block_forward.5} parent=5 // pred_check
      _
    $region10: #{residual_block_forward.5} parent=5 // pred_check_branch
      %135 = sbr.rel (%p132) target = $region12
    $region11: #{residual_block_forward.5} parent=5 // pred_region
      %s136 = ssub.s32 %s9, 1
      // Predicated region
      $region13: #{residual_block_forward.5} parent=11 // pred_check
        %p137 = pneg %p75
      $region14: #{residual_block_forward.5} parent=11 // pred_check_branch
        %139 = sbr.rel (%p137) target = $region16
      $region15: #{residual_block_forward.5} parent=11 // pred_region
        %s140 = smul.u32 5, %s19
        %p141 = scmp.lt.s32.totalorder %s140, 4
        %s142 = scalar_select %p141, %s140, 4
        %s143 = smul.addr %s142, 4
        %s144 = scalar_lea.vmem %s1, %s143
        %s145 = smul.u32 5, %s19
      $region16: #{residual_block_forward.5} parent=11 // pred_fallthru
        _
      // Predicated region
      $region17: #{residual_block_forward.5} parent=11 // pred_check
        %p146 = pneg %p96
      $region18: #{residual_block_forward.5} parent=11 // pred_check_branch
        %148 = sbr.rel (%p146) target = $region20
      $region19: #{residual_block_forward.5} parent=11 // pred_region
        _
      $region20: #{residual_block_forward.5} parent=11 // pred_fallthru
        _
    $region12: #{residual_block_forward.5} parent=5 // pred_fallthru
      _
    %p149 = scmp.lt.s32.totalorder %s9, 2
    // Predicated region
    $region21: #{residual_block_forward.5} parent=5 // pred_check
      %p150 = pneg %p149
    $region22: #{residual_block_forward.5} parent=5 // pred_check_branch
      %152 = sbr.rel (%p150) target = $region24
    $region23: #{residual_block_forward.5} parent=5 // pred_region
      // Predicated region
      $region25: #{residual_block_forward.5} parent=23 // pred_check
        %p153 = pneg %p43
      $region26: #{residual_block_forward.5} parent=23 // pred_check_branch
        %155 = sbr.rel (%p153) target = $region28
      $region27: #{residual_block_forward.5} parent=23 // pred_region
        %s156 = smul.u32 8, %s16
        %p157 = scmp.lt.s32.totalorder %s156, 15
        %s158 = scalar_select %p157, %s156, 15
        %p159 = scmp.lt.s32.totalorder %s17, 0
        %s160 = scalar_select %p159, %s17, 0
        %s161 = sadd.s32 %s160, %s158
        %s162 = smul.addr %s161, 4
        %s163 = scalar_lea.vmem %s0, %s162
        %s164 = smul.u32 8, %s16
      $region28: #{residual_block_forward.5} parent=23 // pred_fallthru
        _
    $region24: #{residual_block_forward.5} parent=5 // pred_fallthru
      _
    %p165 = scmp.le.s32.totalorder 1, %s9
    %p166 = scmp.lt.s32.totalorder %s9, 3
    %p167 = pnand %p165, %p166
    %p168 = pneg %p167
    // Predicated region
    $region29: #{residual_block_forward.5} parent=5 // pred_check
      _
    $region30: #{residual_block_forward.5} parent=5 // pred_check_branch
      %170 = sbr.rel (%p167) target = $region32
    $region31: #{residual_block_forward.5} parent=5 // pred_region
      %s171 = ssub.s32 %s9, 1
      %s172 = smul.u32 8, %s18
      %p173 = scmp.lt.s32.totalorder %s172, 15
      %s174 = scalar_select %p173, %s172, 15
      %p175 = scmp.lt.s32.totalorder %s19, 0
      %s176 = scalar_select %p175, %s19, 0
      %s177 = sadd.s32 %s176, %s174
      %s178 = smul.addr %s177, 4
      %s179 = scalar_lea.vmem %s0, %s178
      %p180 = pneg %p49
      %p181 = pneg %p46
      %s182 = smul.u32 5, %s19
      %p183 = scmp.lt.s32.totalorder %s182, 4
      %s184 = scalar_select %p183, %s182, 4
      %s185 = smul.addr %s184, 4
      %s186 = scalar_lea.vmem %s1, %s185
      %p187 = pneg %p75
      %p188 = pneg %p72
      %p189 = pneg %p96
      %p190 = pneg %p93
      %p191 = pneg %p122
      %p192 = pneg %p119
      %s193 = smul.u32 8, %s18
      %p194 = scmp.lt.s32.totalorder %s193, 15
      %s195 = scalar_select %p194, %s193, 15
      %s196 = smul.addr %s195, 4
      %s197 = scalar_lea.vmem %s3, %s196
      %s198 = smul.u32 8, %s18
      %p199 = scmp.lt.s32.totalorder %s198, 15
      %s200 = scalar_select %p199, %s198, 15
      %p201 = scmp.lt.s32.totalorder %s19, 0
      %s202 = scalar_select %p201, %s19, 0
      %s203 = sadd.s32 %s202, %s200
      %s204 = smul.addr %s203, 4
      %s205 = scalar_lea.vmem %s0, %s204
      %s206 = smul.u32 8, %s18
      %s207 = smul.u32 5, %s19
      %p208 = scmp.lt.s32.totalorder %s207, 4
      %s209 = scalar_select %p208, %s207, 4
      %s210 = smul.addr %s209, 4
      %s211 = scalar_lea.vmem %s1, %s210
      %s212 = smul.u32 5, %s19
      %s213 = smul.u32 8, %s18
      %p214 = scmp.lt.s32.totalorder %s213, 15
      %s215 = scalar_select %p214, %s213, 15
      %s216 = smul.addr %s215, 4
      %s217 = scalar_lea.vmem %s3, %s216
      %s218 = smul.u32 8, %s18
      %p220 = scmp.eq.s32.totalorder %s19, 0
      // Predicated region
      $region33: #{residual_block_forward.5} parent=31 // pred_check
        %p221 = pneg %p220
      $region34: #{residual_block_forward.5} parent=31 // pred_check_branch
        %223 = sbr.rel (%p221) target = $region36
      $region35: #{residual_block_forward.5} parent=31 // pred_region
        %224 = vst [vmem:[#allocation2] sm:$0xff] 0.0
        %225 = vst [vmem:[#allocation2 + $0x8] sm:$0xff] 0.0
        %226 = vst [vmem:[#allocation2 + $0x10] sm:$0xff] 0.0
        %227 = vst [vmem:[#allocation2 + $0x18] sm:$0xff] 0.0
        %228 = vst [vmem:[#allocation2 + $0x20] sm:$0xff] 0.0
        %229 = vst [vmem:[#allocation2 + $0x28] sm:$0xff] 0.0
        %230 = vst [vmem:[#allocation2 + $0x30] sm:$0xff] 0.0
        %231 = vst [vmem:[#allocation2 + $0x38] sm:$0xff] 0.0
      $region36: #{residual_block_forward.5} parent=31 // pred_fallthru
        _
      %v232 = vld [vmem:[#allocation2] sm:$0xff]
      %v233 = vld [vmem:[#allocation2 + $0x8] sm:$0xff]
      %v234 = vld [vmem:[#allocation2 + $0x10] sm:$0xff]
      %v235 = vld [vmem:[#allocation2 + $0x18] sm:$0xff]
      %v236 = vld [vmem:[#allocation2 + $0x20] sm:$0xff]
      %v237 = vld [vmem:[#allocation2 + $0x28] sm:$0xff]
      %v238 = vld [vmem:[#allocation2 + $0x30] sm:$0xff]
      %v239 = vld [vmem:[#allocation2 + $0x38] sm:$0xff]
      %v240 = vld [vmem:[%s205] sm:$0xf]
      %v241 = vld [vmem:[%s205 + $0x4] sm:$0xf]
      %v242 = vld [vmem:[%s205 + $0x8] sm:$0xf]
      %v243 = vld [vmem:[%s205 + $0xc] sm:$0xf]
      %v244 = vld [vmem:[%s205 + $0x10] sm:$0xf]
      %v245 = vld [vmem:[%s205 + $0x14] sm:$0xf]
      %v246 = vld [vmem:[%s205 + $0x18] sm:$0xf]
      %v247 = vld [vmem:[%s205 + $0x1c] sm:$0xf]
      %v248 = vld [vmem:[%s211] sm:$0xf]
      %v249 = vld [vmem:[%s211 + $0x4] sm:$0xf]
      %v250 = vld [vmem:[%s211 + $0x8] sm:$0xf]
      %v251 = vld [vmem:[%s211 + $0xc] sm:$0xf]
      %v252 = vld [vmem:[%s211 + $0x10] sm:$0x3]
      %v261 = vunpack.c.l.b16 %v240
      %v262 = vunpack.c.l.b16 %v241
      %v263 = vunpack.c.l.b16 %v242
      %v264 = vunpack.c.l.b16 %v243
      %v265 = vunpack.c.l.b16 %v244
      %v266 = vunpack.c.l.b16 %v245
      %v267 = vunpack.c.l.b16 %v246
      %v268 = vunpack.c.l.b16 %v247
      %v269 = vpack.c.b16 %v262, %v261
      %v270 = vpack.c.b16 %v264, %v263
      %v271 = vpack.c.b16 %v266, %v265
      %v272 = vpack.c.b16 %v268, %v267
      %v278 = vunpack.c.l.b16 %v248
      %v279 = vunpack.c.l.b16 %v249
      %v280 = vunpack.c.l.b16 %v250
      %v281 = vunpack.c.l.b16 %v251
      %v282 = vunpack.c.l.b16 %v252
      %v283 = vpack.c.b16 %v279, %v278
      %v284 = vpack.c.b16 %v281, %v280
      %v285 = vpack.c.b16 %v282, %v282
      %vm288 = vcmask 293888
      %v290 = vsel %vm288, %v269, 0
      %v293 = vsel %vm288, %v270, 0
      %v296 = vsel %vm288, %v271, 0
      %v299 = vsel %vm288, %v272, 0
      %vm301 = vcmask 1041408
      %v303 = vsel %vm301, %v285, 0
      %305 = vmatpush.bf16.msra.mxu0 0
      %306 = vmatpush.bf16.msra.mxu0 0
      %307 = vmatpush.bf16.msra.mxu0 0
      %308 = vmatpush.bf16.msra.mxu0 0
      %309 = vmatpush.bf16.msra.mxu0 0
      %310 = vmatpush.bf16.msra.mxu0 %v303
      %311 = vmatpush.bf16.msra.mxu0 %v284
      %312 = vmatpush.bf16.msra.mxu0 %v283
      %313 = vmatmul.bf16.gmra.mxu0 %v290
      %v314 = vpop.f32.mrf.mxu0
      %v315 = vadd.f32 0.0, %v314
      %v316 = vpop.f32.mrf.mxu0
      %v317 = vadd.f32 0.0, %v316
      %318 = vmatmul.bf16.gmra.mxu0 %v293
      %v319 = vpop.f32.mrf.mxu0
      %v320 = vadd.f32 0.0, %v319
      %v321 = vpop.f32.mrf.mxu0
      %v322 = vadd.f32 0.0, %v321
      %323 = vmatmul.bf16.gmra.mxu0 %v296
      %v324 = vpop.f32.mrf.mxu0
      %v325 = vadd.f32 0.0, %v324
      %v326 = vpop.f32.mrf.mxu0
      %v327 = vadd.f32 0.0, %v326
      %328 = vmatmul.bf16.gmra.mxu0 %v299
      %v329 = vpop.f32.mrf.mxu0
      %v330 = vadd.f32 0.0, %v329
      %v331 = vpop.f32.mrf.mxu0
      %v332 = vadd.f32 0.0, %v331
      %333 = vdwg.mxu0
      %v334 = vadd.f32 %v232, %v315
      %v335 = vadd.f32 %v233, %v317
      %v336 = vadd.f32 %v234, %v320
      %v337 = vadd.f32 %v235, %v322
      %v338 = vadd.f32 %v236, %v325
      %v339 = vadd.f32 %v237, %v327
      %v340 = vadd.f32 %v238, %v330
      %v341 = vadd.f32 %v239, %v332
      %342 = vst [vmem:[#allocation2] sm:$0xff] %v334
      %343 = vst [vmem:[#allocation2 + $0x8] sm:$0xff] %v335
      %344 = vst [vmem:[#allocation2 + $0x10] sm:$0xff] %v336
      %345 = vst [vmem:[#allocation2 + $0x18] sm:$0xff] %v337
      %346 = vst [vmem:[#allocation2 + $0x20] sm:$0xff] %v338
      %347 = vst [vmem:[#allocation2 + $0x28] sm:$0xff] %v339
      %348 = vst [vmem:[#allocation2 + $0x30] sm:$0xff] %v340
      %349 = vst [vmem:[#allocation2 + $0x38] sm:$0xff] %v341
      // Predicated region
      $region37: #{residual_block_forward.5} parent=31 // pred_check
        %p350 = pneg %p220
      $region38: #{residual_block_forward.5} parent=31 // pred_check_branch
        %352 = sbr.rel (%p350) target = $region40
      $region39: #{residual_block_forward.5} parent=31 // pred_region
        %v353 = vld [vmem:[#allocation2] sm:$0xff]
        %v354 = vld [vmem:[#allocation2 + $0x8] sm:$0xff]
        %v355 = vld [vmem:[#allocation2 + $0x10] sm:$0xff]
        %v356 = vld [vmem:[#allocation2 + $0x18] sm:$0xff]
        %v357 = vld [vmem:[#allocation2 + $0x20] sm:$0xff]
        %v358 = vld [vmem:[#allocation2 + $0x28] sm:$0xff]
        %v359 = vld [vmem:[#allocation2 + $0x30] sm:$0xff]
        %v360 = vld [vmem:[#allocation2 + $0x38] sm:$0xff]
        %v361 = vld [vmem:[%s2] sm:$0x1]
        %v363 = vperm.slane %v361, 0
        %v365 = vadd.f32 %v353, %v363
        %v366 = vadd.f32 %v354, %v363
        %v367 = vadd.f32 %v355, %v363
        %v368 = vadd.f32 %v356, %v363
        %v369 = vadd.f32 %v357, %v363
        %v370 = vadd.f32 %v358, %v363
        %v371 = vadd.f32 %v359, %v363
        %v372 = vadd.f32 %v360, %v363
        %vm373 = vcmp.ge.f32.partialorder %v365, 0.0
        %vm374 = vcmp.ge.f32.partialorder %v366, 0.0
        %vm375 = vcmp.ge.f32.partialorder %v367, 0.0
        %vm376 = vcmp.ge.f32.partialorder %v368, 0.0
        %vm377 = vcmp.ge.f32.partialorder %v369, 0.0
        %vm378 = vcmp.ge.f32.partialorder %v370, 0.0
        %vm379 = vcmp.ge.f32.partialorder %v371, 0.0
        %vm380 = vcmp.ge.f32.partialorder %v372, 0.0
        %v381 = vmul.f32 %v365, 0.1
        %v382 = vmul.f32 %v366, 0.1
        %v383 = vmul.f32 %v367, 0.1
        %v384 = vmul.f32 %v368, 0.1
        %v385 = vmul.f32 %v369, 0.1
        %v386 = vmul.f32 %v370, 0.1
        %v387 = vmul.f32 %v371, 0.1
        %v388 = vmul.f32 %v372, 0.1
        %v389 = vsel %vm373, %v365, %v381
        %v390 = vsel %vm374, %v366, %v382
        %v391 = vsel %vm375, %v367, %v383
        %v392 = vsel %vm376, %v368, %v384
        %v393 = vsel %vm377, %v369, %v385
        %v394 = vsel %vm378, %v370, %v386
        %v395 = vsel %vm379, %v371, %v387
        %v396 = vsel %vm380, %v372, %v388
        %v397 = vpack.c.bf16 %v389, %v389
        %v398 = vpack.c.bf16 %v390, %v390
        %v399 = vpack.c.bf16 %v391, %v391
        %v400 = vpack.c.bf16 %v392, %v392
        %v401 = vpack.c.bf16 %v393, %v393
        %v402 = vpack.c.bf16 %v394, %v394
        %v403 = vpack.c.bf16 %v395, %v395
        %v404 = vpack.c.bf16 %v396, %v396
        %405 = vst [vmem:[%s217] sm:$0xf] %v397
        %406 = vst [vmem:[%s217 + $0x4] sm:$0xf] %v398
        %407 = vst [vmem:[%s217 + $0x8] sm:$0xf] %v399
        %408 = vst [vmem:[%s217 + $0xc] sm:$0xf] %v400
        %409 = vst [vmem:[%s217 + $0x10] sm:$0xf] %v401
        %410 = vst [vmem:[%s217 + $0x14] sm:$0xf] %v402
        %411 = vst [vmem:[%s217 + $0x18] sm:$0xf] %v403
        %412 = vst [vmem:[%s217 + $0x1c] sm:$0xf] %v404
      $region40: #{residual_block_forward.5} parent=31 // pred_fallthru
        _
      %s413 = smul.u32 8, %s18
      %p414 = scmp.lt.s32.totalorder %s413, 15
      %s415 = scalar_select %p414, %s413, 15
      %s416 = smul.addr %s415, 4
      %s417 = scalar_lea.vmem %s3, %s416
      // Predicated region
      $region41: #{residual_block_forward.5} parent=31 // pred_check
        %p418 = pneg %p119
      $region42: #{residual_block_forward.5} parent=31 // pred_check_branch
        %420 = sbr.rel (%p418) target = $region44
      $region43: #{residual_block_forward.5} parent=31 // pred_region
        %s421 = smul.u32 8, %s18
      $region44: #{residual_block_forward.5} parent=31 // pred_fallthru
        _
    $region32: #{residual_block_forward.5} parent=5 // pred_fallthru
      _
    %p422 = scmp.le.s32.totalorder 2, %s9
    // Predicated region
    $region45: #{residual_block_forward.5} parent=5 // pred_check
      %p423 = pneg %p422
    $region46: #{residual_block_forward.5} parent=5 // pred_check_branch
      %425 = sbr.rel (%p423) target = $region48
    $region47: #{residual_block_forward.5} parent=5 // pred_region
      %s426 = ssub.s32 %s9, 2
      // Predicated region
      $region49: #{residual_block_forward.5} parent=47 // pred_check
        %p427 = pneg %p125
      $region50: #{residual_block_forward.5} parent=47 // pred_check_branch
        %429 = sbr.rel (%p427) target = $region52
      $region51: #{residual_block_forward.5} parent=47 // pred_region
        %s430 = smul.u32 8, %s20
        %p431 = scmp.lt.s32.totalorder %s430, 15
        %s432 = scalar_select %p431, %s430, 15
        %s433 = smul.addr %s432, 4
        %s434 = scalar_lea.vmem %s3, %s433
      $region52: #{residual_block_forward.5} parent=47 // pred_fallthru
        _
    $region48: #{residual_block_forward.5} parent=5 // pred_fallthru
      _
  $region6: #{residual_block_forward.5} parent=0 // loop_footer
    %s13 = sadd.s32 1, %s9
  $region7: #{residual_block_forward.5} parent=0 // loop_footer_branch
    %8 = sbr.rel target = $region3
  $region8: #{residual_block_forward.5} parent=0 // loop_exit
    _

// kernel: residual_block_forward.6
$region0: #{residual_block_forward.6}
  #allocation0 [shape = 'u32[]', space=smem, size = 0x4, offset = 0x4, fixed_abs, tag = 'smem constant byte address 0x4 - core index']
  #allocation1 [shape = 'u32[72,128]{1,0:T(1,128)}', space=vmem, size = 0x9000, scoped, tag = 'internal scratch']
  #allocation2 [shape = 'f32[64,128]{1,0:T(8,128)}', space=vmem, size = 0x8000, scoped, tag = 'scratch operand']
  %s0 = inlined_call_operand.vmem [shape: bf16[128,8], index: 0, kind: input, shape index: {}]
  %s1 = inlined_call_operand.vmem [shape: bf16[8,128], index: 1, kind: input, shape index: {}]
  %s2 = inlined_call_operand.vmem [shape: f32[1,128], index: 2, kind: input, shape index: {}]
  %s3 = inlined_call_operand.vmem [shape: bf16[128,128], index: 3, kind: output, shape index: {}]
  %s4 = sld [smem:[#allocation0]]
  $region53: #{residual_block_forward.6} parent=0
    _
  %s6 = ssub.s32 1, %s4
  %s7 = scalar_select 0, %s6, %s4
  loop: start=0, step=1, limit=4
  $region2: #{residual_block_forward.6} parent=0 // loop_pre_header
    _
  $region3: #{residual_block_forward.6} parent=0 // loop_header
    %s9 = sphi 0, %s13
    %p10 = scmp.ge.s32.totalorder %s9, 4
    %s16 = sphi 0, %s28
    %s17 = sphi 0, %s24
    %s18 = sphi 0, %s16
    %s19 = sphi 0, %s17
    %s20 = sphi 0, %s18
    %s21 = sphi 0, %s19
    %s33 = sphi 0, %s35
    %s36 = sphi 0, %s33
    %s37 = sphi 0, %s36
    %s53 = sphi 0, %s37
    %s59 = sphi 0, %s61
    %s62 = sphi 0, %s59
    %s63 = sphi 0, %s62
    %s79 = sphi 0, %s63
    %s83 = sphi 0, %s83
    %s85 = sphi 0, %s83
    %s86 = sphi 0, %s85
    %s100 = sphi 0, %s86
    %s106 = sphi 0, %s108
    %s109 = sphi 0, %s106
    %s110 = sphi 0, %s109
    %s126 = sphi 0, %s110
  $region4: #{residual_block_forward.6} parent=0 // loop_header_branch
    %12 = sbr.rel (%p10) target = $region8
  $region5: #{residual_block_forward.6} parent=0 // loop_body
    %s14 = ssub.s32 %s9, 1
    %s15 = ssub.s32 %s9, 2
    %s22 = sadd.s32 1, %s17
    %p23 = scmp.ge.s32.totalorder %s22, 1
    %s24 = scalar_select %p23, 0, %s22
    %s25 = sadd.s32 1, %s16
    %s26 = scalar_select %p23, %s25, %s16
    %p27 = scmp.ge.s32.totalorder %s26, 2
    %s28 = scalar_select %p27, 0, %s26
    %s29 = ssub.s32 %s16, %s28
    %s30 = ssub.s32 %s17, %s24
    %s31 = sor.u32 %s29, %s30
    %p32 = scmp.eq.s32.totalorder %s31, 0
    %s34 = sadd.s32 %s33, 1
    %s35 = scalar_select %p32, %s33, %s34
    %p38 = pneg %p32
    %p39 = scmp.eq.s32.totalorder %s9, 1
    %p40 = por %p38, %p39
    %p41 = scmp.ne.s32.totalorder %s33, %s36
    %p42 = scmp.eq.s32.totalorder %s9, 0
    %p43 = por %p41, %p42
    %p44 = scmp.ne.s32.totalorder %s33, %s36
    %p45 = scmp.eq.s32.totalorder %s14, 1
    %p46 = por %p44, %p45
    %p47 = scmp.ne.s32.totalorder %s36, %s37
    %p48 = scmp.eq.s32.totalorder %s14, 0
    %p49 = por %p47, %p48
    %p50 = scmp.ne.s32.totalorder %s36, %s37
    %p51 = scmp.eq.s32.totalorder %s15, 1
    %p52 = por %p50, %p51
    %p54 = scmp.ne.s32.totalorder %s37, %s53
    %p55 = scmp.eq.s32.totalorder %s15, 0
    %p56 = por %p54, %p55
    %s57 = ssub.s32 %s17, %s24
    %p58 = scmp.eq.s32.totalorder %s57, 0
    %s60 = sadd.s32 %s59, 1
    %s61 = scalar_select %p58, %s59, %s60
    %p64 = pneg %p58
    %p65 = scmp.eq.s32.totalorder %s9, 1
    %p66 = por %p64, %p65
    %p67 = scmp.ne.s32.totalorder %s59, %s62
    %p68 = scmp.eq.s32.totalorder %s9, 0
    %p69 = por %p67, %p68
    %p70 = scmp.ne.s32.totalorder %s59, %s62
    %p71 = scmp.eq.s32.totalorder %s14, 1
    %p72 = por %p70, %p71
    %p73 = scmp.ne.s32.totalorder %s62, %s63
    %p74 = scmp.eq.s32.totalorder %s14, 0
    %p75 = por %p73, %p74
    %p76 = scmp.ne.s32.totalorder %s62, %s63
    %p77 = scmp.eq.s32.totalorder %s15, 1
    %p78 = por %p76, %p77
    %p80 = scmp.ne.s32.totalorder %s63, %s79
    %p81 = scmp.eq.s32.totalorder %s15, 0
    %p82 = por %p80, %p81
    %s84 = sadd.s32 %s83, 1
    %p87 = scmp.eq.s32.totalorder %s9, 1
    %p88 = scmp.ne.s32.totalorder %s83, %s85
    %p89 = scmp.eq.s32.totalorder %s9, 0
    %p90 = por %p88, %p89
    %p91 = scmp.ne.s32.totalorder %s83, %s85
    %p92 = scmp.eq.s32.totalorder %s14, 1
    %p93 = por %p91, %p92
    %p94 = scmp.ne.s32.totalorder %s85, %s86
    %p95 = scmp.eq.s32.totalorder %s14, 0
    %p96 = por %p94, %p95
    %p97 = scmp.ne.s32.totalorder %s85, %s86
    %p98 = scmp.eq.s32.totalorder %s15, 1
    %p99 = por %p97, %p98
    %p101 = scmp.ne.s32.totalorder %s86, %s100
    %p102 = scmp.eq.s32.totalorder %s15, 0
    %p103 = por %p101, %p102
    %s104 = ssub.s32 %s16, %s28
    %p105 = scmp.eq.s32.totalorder %s104, 0
    %s107 = sadd.s32 %s106, 1
    %s108 = scalar_select %p105, %s106, %s107
    %p111 = pneg %p105
    %p112 = scmp.eq.s32.totalorder %s9, 1
    %p113 = por %p111, %p112
    %p114 = scmp.ne.s32.totalorder %s106, %s109
    %p115 = scmp.eq.s32.totalorder %s9, 0
    %p116 = por %p114, %p115
    %p117 = scmp.ne.s32.totalorder %s106, %s109
    %p118 = scmp.eq.s32.totalorder %s14, 1
    %p119 = por %p117, %p118
    %p120 = scmp.ne.s32.totalorder %s109, %s110
    %p121 = scmp.eq.s32.totalorder %s14, 0
    %p122 = por %p120, %p121
    %p123 = scmp.ne.s32.totalorder %s109, %s110
    %p124 = scmp.eq.s32.totalorder %s15, 1
    %p125 = por %p123, %p124
    %p127 = scmp.ne.s32.totalorder %s110, %s126
    %p128 = scmp.eq.s32.totalorder %s15, 0
    %p129 = por %p127, %p128
    %p130 = scmp.le.s32.totalorder 1, %s9
    %p131 = scmp.lt.s32.totalorder %s9, 3
    %p132 = pnand %p130, %p131
    %p133 = pneg %p132
    // Predicated region
    $region9: #{residual_block_forward.6} parent=5 // pred_check
      _
    $region10: #{residual_block_forward.6} parent=5 // pred_check_branch
      %135 = sbr.rel (%p132) target = $region12
    $region11: #{residual_block_forward.6} parent=5 // pred_region
      %s136 = ssub.s32 %s9, 1
      // Predicated region
      $region13: #{residual_block_forward.6} parent=11 // pred_check
        %p137 = pneg %p75
      $region14: #{residual_block_forward.6} parent=11 // pred_check_branch
        %139 = sbr.rel (%p137) target = $region16
      $region15: #{residual_block_forward.6} parent=11 // pred_region
        %p140 = scmp.lt.s32.totalorder %s19, 0
        %s141 = scalar_select %p140, %s19, 0
        %s142 = smul.addr %s141, 4
        %s143 = scalar_lea.vmem %s1, %s142
      $region16: #{residual_block_forward.6} parent=11 // pred_fallthru
        _
      // Predicated region
      $region17: #{residual_block_forward.6} parent=11 // pred_check
        %p144 = pneg %p96
      $region18: #{residual_block_forward.6} parent=11 // pred_check_branch
        %146 = sbr.rel (%p144) target = $region20
      $region19: #{residual_block_forward.6} parent=11 // pred_region
        _
      $region20: #{residual_block_forward.6} parent=11 // pred_fallthru
        _
    $region12: #{residual_block_forward.6} parent=5 // pred_fallthru
      _
    %p147 = scmp.lt.s32.totalorder %s9, 2
    // Predicated region
    $region21: #{residual_block_forward.6} parent=5 // pred_check
      %p148 = pneg %p147
    $region22: #{residual_block_forward.6} parent=5 // pred_check_branch
      %150 = sbr.rel (%p148) target = $region24
    $region23: #{residual_block_forward.6} parent=5 // pred_region
      // Predicated region
      $region25: #{residual_block_forward.6} parent=23 // pred_check
        %p151 = pneg %p43
      $region26: #{residual_block_forward.6} parent=23 // pred_check_branch
        %153 = sbr.rel (%p151) target = $region28
      $region27: #{residual_block_forward.6} parent=23 // pred_region
        %s154 = smul.u32 8, %s16
        %p155 = scmp.lt.s32.totalorder %s154, 15
        %s156 = scalar_select %p155, %s154, 15
        %p157 = scmp.lt.s32.totalorder %s17, 0
        %s158 = scalar_select %p157, %s17, 0
        %s159 = sadd.s32 %s158, %s156
        %s160 = smul.addr %s159, 4
        %s161 = scalar_lea.vmem %s0, %s160
        %s162 = smul.u32 8, %s16
      $region28: #{residual_block_forward.6} parent=23 // pred_fallthru
        _
    $region24: #{residual_block_forward.6} parent=5 // pred_fallthru
      _
    %p163 = scmp.le.s32.totalorder 1, %s9
    %p164 = scmp.lt.s32.totalorder %s9, 3
    %p165 = pnand %p163, %p164
    %p166 = pneg %p165
    // Predicated region
    $region29: #{residual_block_forward.6} parent=5 // pred_check
      _
    $region30: #{residual_block_forward.6} parent=5 // pred_check_branch
      %168 = sbr.rel (%p165) target = $region32
    $region31: #{residual_block_forward.6} parent=5 // pred_region
      %s169 = ssub.s32 %s9, 1
      %s170 = smul.u32 8, %s18
      %p171 = scmp.lt.s32.totalorder %s170, 15
      %s172 = scalar_select %p171, %s170, 15
      %p173 = scmp.lt.s32.totalorder %s19, 0
      %s174 = scalar_select %p173, %s19, 0
      %s175 = sadd.s32 %s174, %s172
      %s176 = smul.addr %s175, 4
      %s177 = scalar_lea.vmem %s0, %s176
      %p178 = pneg %p49
      %p179 = pneg %p46
      %p180 = scmp.lt.s32.totalorder %s19, 0
      %s181 = scalar_select %p180, %s19, 0
      %s182 = smul.addr %s181, 4
      %s183 = scalar_lea.vmem %s1, %s182
      %p184 = pneg %p75
      %p185 = pneg %p72
      %p186 = pneg %p96
      %p187 = pneg %p93
      %p188 = pneg %p122
      %p189 = pneg %p119
      %s190 = smul.u32 8, %s18
      %p191 = scmp.lt.s32.totalorder %s190, 15
      %s192 = scalar_select %p191, %s190, 15
      %s193 = smul.addr %s192, 4
      %s194 = scalar_lea.vmem %s3, %s193
      %s195 = smul.u32 8, %s18
      %p196 = scmp.lt.s32.totalorder %s195, 15
      %s197 = scalar_select %p196, %s195, 15
      %p198 = scmp.lt.s32.totalorder %s19, 0
      %s199 = scalar_select %p198, %s19, 0
      %s200 = sadd.s32 %s199, %s197
      %s201 = smul.addr %s200, 4
      %s202 = scalar_lea.vmem %s0, %s201
      %s203 = smul.u32 8, %s18
      %p204 = scmp.lt.s32.totalorder %s19, 0
      %s205 = scalar_select %p204, %s19, 0
      %s206 = smul.addr %s205, 4
      %s207 = scalar_lea.vmem %s1, %s206
      %s208 = smul.u32 8, %s18
      %p209 = scmp.lt.s32.totalorder %s208, 15
      %s210 = scalar_select %p209, %s208, 15
      %s211 = smul.addr %s210, 4
      %s212 = scalar_lea.vmem %s3, %s211
      %s213 = smul.u32 8, %s18
      %p215 = scmp.eq.s32.totalorder %s19, 0
      // Predicated region
      $region33: #{residual_block_forward.6} parent=31 // pred_check
        %p216 = pneg %p215
      $region34: #{residual_block_forward.6} parent=31 // pred_check_branch
        %218 = sbr.rel (%p216) target = $region36
      $region35: #{residual_block_forward.6} parent=31 // pred_region
        %219 = vst [vmem:[#allocation2] sm:$0xff] 0.0
        %220 = vst [vmem:[#allocation2 + $0x8] sm:$0xff] 0.0
        %221 = vst [vmem:[#allocation2 + $0x10] sm:$0xff] 0.0
        %222 = vst [vmem:[#allocation2 + $0x18] sm:$0xff] 0.0
        %223 = vst [vmem:[#allocation2 + $0x20] sm:$0xff] 0.0
        %224 = vst [vmem:[#allocation2 + $0x28] sm:$0xff] 0.0
        %225 = vst [vmem:[#allocation2 + $0x30] sm:$0xff] 0.0
        %226 = vst [vmem:[#allocation2 + $0x38] sm:$0xff] 0.0
      $region36: #{residual_block_forward.6} parent=31 // pred_fallthru
        _
      %v227 = vld [vmem:[#allocation2] sm:$0xff]
      %v228 = vld [vmem:[#allocation2 + $0x8] sm:$0xff]
      %v229 = vld [vmem:[#allocation2 + $0x10] sm:$0xff]
      %v230 = vld [vmem:[#allocation2 + $0x18] sm:$0xff]
      %v231 = vld [vmem:[#allocation2 + $0x20] sm:$0xff]
      %v232 = vld [vmem:[#allocation2 + $0x28] sm:$0xff]
      %v233 = vld [vmem:[#allocation2 + $0x30] sm:$0xff]
      %v234 = vld [vmem:[#allocation2 + $0x38] sm:$0xff]
      %v235 = vld [vmem:[%s202] sm:$0xf]
      %v236 = vld [vmem:[%s202 + $0x4] sm:$0xf]
      %v237 = vld [vmem:[%s202 + $0x8] sm:$0xf]
      %v238 = vld [vmem:[%s202 + $0xc] sm:$0xf]
      %v239 = vld [vmem:[%s202 + $0x10] sm:$0xf]
      %v240 = vld [vmem:[%s202 + $0x14] sm:$0xf]
      %v241 = vld [vmem:[%s202 + $0x18] sm:$0xf]
      %v242 = vld [vmem:[%s202 + $0x1c] sm:$0xf]
      %v243 = vld [vmem:[%s207] sm:$0xf]
      %v252 = vunpack.c.l.b16 %v235
      %v253 = vunpack.c.l.b16 %v236
      %v254 = vunpack.c.l.b16 %v237
      %v255 = vunpack.c.l.b16 %v238
      %v256 = vunpack.c.l.b16 %v239
      %v257 = vunpack.c.l.b16 %v240
      %v258 = vunpack.c.l.b16 %v241
      %v259 = vunpack.c.l.b16 %v242
      %v260 = vpack.c.b16 %v253, %v252
      %v261 = vpack.c.b16 %v255, %v254
      %v262 = vpack.c.b16 %v257, %v256
      %v263 = vpack.c.b16 %v259, %v258
      %vm264 = vcmask 64512
      %v266 = vsel %vm264, %v260, 0
      %v269 = vsel %vm264, %v261, 0
      %v272 = vsel %vm264, %v262, 0
      %v275 = vsel %vm264, %v263, 0
      %vm277 = vcmask 1043456
      %v279 = vsel %vm277, %v243, 0
      %281 = vmatpush.bf16.msra.mxu0 0
      %282 = vmatpush.bf16.msra.mxu0 0
      %283 = vmatpush.bf16.msra.mxu0 0
      %284 = vmatpush.bf16.msra.mxu0 0
      %285 = vmatpush.bf16.msra.mxu0 0
      %286 = vmatpush.bf16.msra.mxu0 0
      %287 = vmatpush.bf16.msra.mxu0 0
      %288 = vmatpush.bf16.msra.mxu0 %v279
      %289 = vmatmul.bf16.gmra.mxu0 %v266
      %v290 = vpop.f32.mrf.mxu0
      %v291 = vadd.f32 0.0, %v290
      %v292 = vpop.f32.mrf.mxu0
      %v293 = vadd.f32 0.0, %v292
      %294 = vmatmul.bf16.gmra.mxu0 %v269
      %v295 = vpop.f32.mrf.mxu0
      %v296 = vadd.f32 0.0, %v295
      %v297 = vpop.f32.mrf.mxu0
      %v298 = vadd.f32 0.0, %v297
      %299 = vmatmul.bf16.gmra.mxu0 %v272
      %v300 = vpop.f32.mrf.mxu0
      %v301 = vadd.f32 0.0, %v300
      %v302 = vpop.f32.mrf.mxu0
      %v303 = vadd.f32 0.0, %v302
      %304 = vmatmul.bf16.gmra.mxu0 %v275
      %v305 = vpop.f32.mrf.mxu0
      %v306 = vadd.f32 0.0, %v305
      %v307 = vpop.f32.mrf.mxu0
      %v308 = vadd.f32 0.0, %v307
      %309 = vdwg.mxu0
      %v310 = vadd.f32 %v227, %v291
      %v311 = vadd.f32 %v228, %v293
      %v312 = vadd.f32 %v229, %v296
      %v313 = vadd.f32 %v230, %v298
      %v314 = vadd.f32 %v231, %v301
      %v315 = vadd.f32 %v232, %v303
      %v316 = vadd.f32 %v233, %v306
      %v317 = vadd.f32 %v234, %v308
      %318 = vst [vmem:[#allocation2] sm:$0xff] %v310
      %319 = vst [vmem:[#allocation2 + $0x8] sm:$0xff] %v311
      %320 = vst [vmem:[#allocation2 + $0x10] sm:$0xff] %v312
      %321 = vst [vmem:[#allocation2 + $0x18] sm:$0xff] %v313
      %322 = vst [vmem:[#allocation2 + $0x20] sm:$0xff] %v314
      %323 = vst [vmem:[#allocation2 + $0x28] sm:$0xff] %v315
      %324 = vst [vmem:[#allocation2 + $0x30] sm:$0xff] %v316
      %325 = vst [vmem:[#allocation2 + $0x38] sm:$0xff] %v317
      // Predicated region
      $region37: #{residual_block_forward.6} parent=31 // pred_check
        %p326 = pneg %p215
      $region38: #{residual_block_forward.6} parent=31 // pred_check_branch
        %328 = sbr.rel (%p326) target = $region40
      $region39: #{residual_block_forward.6} parent=31 // pred_region
        %v329 = vld [vmem:[#allocation2] sm:$0xff]
        %v330 = vld [vmem:[#allocation2 + $0x8] sm:$0xff]
        %v331 = vld [vmem:[#allocation2 + $0x10] sm:$0xff]
        %v332 = vld [vmem:[#allocation2 + $0x18] sm:$0xff]
        %v333 = vld [vmem:[#allocation2 + $0x20] sm:$0xff]
        %v334 = vld [vmem:[#allocation2 + $0x28] sm:$0xff]
        %v335 = vld [vmem:[#allocation2 + $0x30] sm:$0xff]
        %v336 = vld [vmem:[#allocation2 + $0x38] sm:$0xff]
        %v337 = vld [vmem:[%s2] sm:$0x1]
        %v339 = vperm.slane %v337, 0
        %v341 = vadd.f32 %v329, %v339
        %v342 = vadd.f32 %v330, %v339
        %v343 = vadd.f32 %v331, %v339
        %v344 = vadd.f32 %v332, %v339
        %v345 = vadd.f32 %v333, %v339
        %v346 = vadd.f32 %v334, %v339
        %v347 = vadd.f32 %v335, %v339
        %v348 = vadd.f32 %v336, %v339
        %vm349 = vcmp.ge.f32.partialorder %v341, 0.0
        %vm350 = vcmp.ge.f32.partialorder %v342, 0.0
        %vm351 = vcmp.ge.f32.partialorder %v343, 0.0
        %vm352 = vcmp.ge.f32.partialorder %v344, 0.0
        %vm353 = vcmp.ge.f32.partialorder %v345, 0.0
        %vm354 = vcmp.ge.f32.partialorder %v346, 0.0
        %vm355 = vcmp.ge.f32.partialorder %v347, 0.0
        %vm356 = vcmp.ge.f32.partialorder %v348, 0.0
        %v357 = vmul.f32 %v341, 0.1
        %v358 = vmul.f32 %v342, 0.1
        %v359 = vmul.f32 %v343, 0.1
        %v360 = vmul.f32 %v344, 0.1
        %v361 = vmul.f32 %v345, 0.1
        %v362 = vmul.f32 %v346, 0.1
        %v363 = vmul.f32 %v347, 0.1
        %v364 = vmul.f32 %v348, 0.1
        %v365 = vsel %vm349, %v341, %v357
        %v366 = vsel %vm350, %v342, %v358
        %v367 = vsel %vm351, %v343, %v359
        %v368 = vsel %vm352, %v344, %v360
        %v369 = vsel %vm353, %v345, %v361
        %v370 = vsel %vm354, %v346, %v362
        %v371 = vsel %vm355, %v347, %v363
        %v372 = vsel %vm356, %v348, %v364
        %v373 = vpack.c.bf16 %v365, %v365
        %v374 = vpack.c.bf16 %v366, %v366
        %v375 = vpack.c.bf16 %v367, %v367
        %v376 = vpack.c.bf16 %v368, %v368
        %v377 = vpack.c.bf16 %v369, %v369
        %v378 = vpack.c.bf16 %v370, %v370
        %v379 = vpack.c.bf16 %v371, %v371
        %v380 = vpack.c.bf16 %v372, %v372
        %381 = vst [vmem:[%s212] sm:$0xf] %v373
        %382 = vst [vmem:[%s212 + $0x4] sm:$0xf] %v374
        %383 = vst [vmem:[%s212 + $0x8] sm:$0xf] %v375
        %384 = vst [vmem:[%s212 + $0xc] sm:$0xf] %v376
        %385 = vst [vmem:[%s212 + $0x10] sm:$0xf] %v377
        %386 = vst [vmem:[%s212 + $0x14] sm:$0xf] %v378
        %387 = vst [vmem:[%s212 + $0x18] sm:$0xf] %v379
        %388 = vst [vmem:[%s212 + $0x1c] sm:$0xf] %v380
      $region40: #{residual_block_forward.6} parent=31 // pred_fallthru
        _
      %s389 = smul.u32 8, %s18
      %p390 = scmp.lt.s32.totalorder %s389, 15
      %s391 = scalar_select %p390, %s389, 15
      %s392 = smul.addr %s391, 4
      %s393 = scalar_lea.vmem %s3, %s392
      // Predicated region
      $region41: #{residual_block_forward.6} parent=31 // pred_check
        %p394 = pneg %p119
      $region42: #{residual_block_forward.6} parent=31 // pred_check_branch
        %396 = sbr.rel (%p394) target = $region44
      $region43: #{residual_block_forward.6} parent=31 // pred_region
        %s397 = smul.u32 8, %s18
      $region44: #{residual_block_forward.6} parent=31 // pred_fallthru
        _
    $region32: #{residual_block_forward.6} parent=5 // pred_fallthru
      _
    %p398 = scmp.le.s32.totalorder 2, %s9
    // Predicated region
    $region45: #{residual_block_forward.6} parent=5 // pred_check
      %p399 = pneg %p398
    $region46: #{residual_block_forward.6} parent=5 // pred_check_branch
      %401 = sbr.rel (%p399) target = $region48
    $region47: #{residual_block_forward.6} parent=5 // pred_region
      %s402 = ssub.s32 %s9, 2
      // Predicated region
      $region49: #{residual_block_forward.6} parent=47 // pred_check
        %p403 = pneg %p125
      $region50: #{residual_block_forward.6} parent=47 // pred_check_branch
        %405 = sbr.rel (%p403) target = $region52
      $region51: #{residual_block_forward.6} parent=47 // pred_region
        %s406 = smul.u32 8, %s20
        %p407 = scmp.lt.s32.totalorder %s406, 15
        %s408 = scalar_select %p407, %s406, 15
        %s409 = smul.addr %s408, 4
        %s410 = scalar_lea.vmem %s3, %s409
      $region52: #{residual_block_forward.6} parent=47 // pred_fallthru
        _
    $region48: #{residual_block_forward.6} parent=5 // pred_fallthru
      _
  $region6: #{residual_block_forward.6} parent=0 // loop_footer
    %s13 = sadd.s32 1, %s9
  $region7: #{residual_block_forward.6} parent=0 // loop_footer_branch
    %8 = sbr.rel target = $region3
  $region8: #{residual_block_forward.6} parent=0 // loop_exit
    _

// kernel: residual_block_forward.7
$region0: #{residual_block_forward.7}
  #allocation0 [shape = 'u32[]', space=smem, size = 0x4, offset = 0x4, fixed_abs, tag = 'smem constant byte address 0x4 - core index']
  #allocation1 [shape = 'u32[72,128]{1,0:T(1,128)}', space=vmem, size = 0x9000, scoped, tag = 'internal scratch']
  #allocation2 [shape = 'f32[64,128]{1,0:T(8,128)}', space=vmem, size = 0x8000, scoped, tag = 'scratch operand']
  %s0 = inlined_call_operand.vmem [shape: bf16[128,36], index: 0, kind: input, shape index: {}]
  %s1 = inlined_call_operand.vmem [shape: bf16[36,128], index: 1, kind: input, shape index: {}]
  %s2 = inlined_call_operand.vmem [shape: f32[1,128], index: 2, kind: input, shape index: {}]
  %s3 = inlined_call_operand.vmem [shape: bf16[128,128], index: 3, kind: input, shape index: {}]
  %s4 = inlined_call_operand.vmem [shape: bf16[128,128], index: 4, kind: output, shape index: {}]
  %s5 = sld [smem:[#allocation0]]
  $region57: #{residual_block_forward.7} parent=0
    _
  %s7 = ssub.s32 1, %s5
  %s8 = scalar_select 0, %s7, %s5
  loop: start=0, step=1, limit=4
  $region2: #{residual_block_forward.7} parent=0 // loop_pre_header
    _
  $region3: #{residual_block_forward.7} parent=0 // loop_header
    %s10 = sphi 0, %s14
    %p11 = scmp.ge.s32.totalorder %s10, 4
    %s17 = sphi 0, %s29
    %s18 = sphi 0, %s25
    %s19 = sphi 0, %s17
    %s20 = sphi 0, %s18
    %s21 = sphi 0, %s19
    %s22 = sphi 0, %s20
    %s34 = sphi 0, %s36
    %s37 = sphi 0, %s34
    %s38 = sphi 0, %s37
    %s54 = sphi 0, %s38
    %s60 = sphi 0, %s62
    %s63 = sphi 0, %s60
    %s64 = sphi 0, %s63
    %s80 = sphi 0, %s64
    %s84 = sphi 0, %s84
    %s86 = sphi 0, %s84
    %s87 = sphi 0, %s86
    %s101 = sphi 0, %s87
    %s107 = sphi 0, %s109
    %s110 = sphi 0, %s107
    %s111 = sphi 0, %s110
    %s127 = sphi 0, %s111
    %s133 = sphi 0, %s135
    %s136 = sphi 0, %s133
    %s137 = sphi 0, %s136
    %s153 = sphi 0, %s137
  $region4: #{residual_block_forward.7} parent=0 // loop_header_branch
    %13 = sbr.rel (%p11) target = $region8
  $region5: #{residual_block_forward.7} parent=0 // loop_body
    %s15 = ssub.s32 %s10, 1
    %s16 = ssub.s32 %s10, 2
    %s23 = sadd.s32 1, %s18
    %p24 = scmp.ge.s32.totalorder %s23, 1
    %s25 = scalar_select %p24, 0, %s23
    %s26 = sadd.s32 1, %s17
    %s27 = scalar_select %p24, %s26, %s17
    %p28 = scmp.ge.s32.totalorder %s27, 2
    %s29 = scalar_select %p28, 0, %s27
    %s30 = ssub.s32 %s17, %s29
    %s31 = ssub.s32 %s18, %s25
    %s32 = sor.u32 %s30, %s31
    %p33 = scmp.eq.s32.totalorder %s32, 0
    %s35 = sadd.s32 %s34, 1
    %s36 = scalar_select %p33, %s34, %s35
    %p39 = pneg %p33
    %p40 = scmp.eq.s32.totalorder %s10, 1
    %p41 = por %p39, %p40
    %p42 = scmp.ne.s32.totalorder %s34, %s37
    %p43 = scmp.eq.s32.totalorder %s10, 0
    %p44 = por %p42, %p43
    %p45 = scmp.ne.s32.totalorder %s34, %s37
    %p46 = scmp.eq.s32.totalorder %s15, 1
    %p47 = por %p45, %p46
    %p48 = scmp.ne.s32.totalorder %s37, %s38
    %p49 = scmp.eq.s32.totalorder %s15, 0
    %p50 = por %p48, %p49
    %p51 = scmp.ne.s32.totalorder %s37, %s38
    %p52 = scmp.eq.s32.totalorder %s16, 1
    %p53 = por %p51, %p52
    %p55 = scmp.ne.s32.totalorder %s38, %s54
    %p56 = scmp.eq.s32.totalorder %s16, 0
    %p57 = por %p55, %p56
    %s58 = ssub.s32 %s18, %s25
    %p59 = scmp.eq.s32.totalorder %s58, 0
    %s61 = sadd.s32 %s60, 1
    %s62 = scalar_select %p59, %s60, %s61
    %p65 = pneg %p59
    %p66 = scmp.eq.s32.totalorder %s10, 1
    %p67 = por %p65, %p66
    %p68 = scmp.ne.s32.totalorder %s60, %s63
    %p69 = scmp.eq.s32.totalorder %s10, 0
    %p70 = por %p68, %p69
    %p71 = scmp.ne.s32.totalorder %s60, %s63
    %p72 = scmp.eq.s32.totalorder %s15, 1
    %p73 = por %p71, %p72
    %p74 = scmp.ne.s32.totalorder %s63, %s64
    %p75 = scmp.eq.s32.totalorder %s15, 0
    %p76 = por %p74, %p75
    %p77 = scmp.ne.s32.totalorder %s63, %s64
    %p78 = scmp.eq.s32.totalorder %s16, 1
    %p79 = por %p77, %p78
    %p81 = scmp.ne.s32.totalorder %s64, %s80
    %p82 = scmp.eq.s32.totalorder %s16, 0
    %p83 = por %p81, %p82
    %s85 = sadd.s32 %s84, 1
    %p88 = scmp.eq.s32.totalorder %s10, 1
    %p89 = scmp.ne.s32.totalorder %s84, %s86
    %p90 = scmp.eq.s32.totalorder %s10, 0
    %p91 = por %p89, %p90
    %p92 = scmp.ne.s32.totalorder %s84, %s86
    %p93 = scmp.eq.s32.totalorder %s15, 1
    %p94 = por %p92, %p93
    %p95 = scmp.ne.s32.totalorder %s86, %s87
    %p96 = scmp.eq.s32.totalorder %s15, 0
    %p97 = por %p95, %p96
    %p98 = scmp.ne.s32.totalorder %s86, %s87
    %p99 = scmp.eq.s32.totalorder %s16, 1
    %p100 = por %p98, %p99
    %p102 = scmp.ne.s32.totalorder %s87, %s101
    %p103 = scmp.eq.s32.totalorder %s16, 0
    %p104 = por %p102, %p103
    %s105 = ssub.s32 %s17, %s29
    %p106 = scmp.eq.s32.totalorder %s105, 0
    %s108 = sadd.s32 %s107, 1
    %s109 = scalar_select %p106, %s107, %s108
    %p112 = pneg %p106
    %p113 = scmp.eq.s32.totalorder %s10, 1
    %p114 = por %p112, %p113
    %p115 = scmp.ne.s32.totalorder %s107, %s110
    %p116 = scmp.eq.s32.totalorder %s10, 0
    %p117 = por %p115, %p116
    %p118 = scmp.ne.s32.totalorder %s107, %s110
    %p119 = scmp.eq.s32.totalorder %s15, 1
    %p120 = por %p118, %p119
    %p121 = scmp.ne.s32.totalorder %s110, %s111
    %p122 = scmp.eq.s32.totalorder %s15, 0
    %p123 = por %p121, %p122
    %p124 = scmp.ne.s32.totalorder %s110, %s111
    %p125 = scmp.eq.s32.totalorder %s16, 1
    %p126 = por %p124, %p125
    %p128 = scmp.ne.s32.totalorder %s111, %s127
    %p129 = scmp.eq.s32.totalorder %s16, 0
    %p130 = por %p128, %p129
    %s131 = ssub.s32 %s17, %s29
    %p132 = scmp.eq.s32.totalorder %s131, 0
    %s134 = sadd.s32 %s133, 1
    %s135 = scalar_select %p132, %s133, %s134
    %p138 = pneg %p132
    %p139 = scmp.eq.s32.totalorder %s10, 1
    %p140 = por %p138, %p139
    %p141 = scmp.ne.s32.totalorder %s133, %s136
    %p142 = scmp.eq.s32.totalorder %s10, 0
    %p143 = por %p141, %p142
    %p144 = scmp.ne.s32.totalorder %s133, %s136
    %p145 = scmp.eq.s32.totalorder %s15, 1
    %p146 = por %p144, %p145
    %p147 = scmp.ne.s32.totalorder %s136, %s137
    %p148 = scmp.eq.s32.totalorder %s15, 0
    %p149 = por %p147, %p148
    %p150 = scmp.ne.s32.totalorder %s136, %s137
    %p151 = scmp.eq.s32.totalorder %s16, 1
    %p152 = por %p150, %p151
    %p154 = scmp.ne.s32.totalorder %s137, %s153
    %p155 = scmp.eq.s32.totalorder %s16, 0
    %p156 = por %p154, %p155
    %p157 = scmp.le.s32.totalorder 1, %s10
    %p158 = scmp.lt.s32.totalorder %s10, 3
    %p159 = pnand %p157, %p158
    %p160 = pneg %p159
    // Predicated region
    $region9: #{residual_block_forward.7} parent=5 // pred_check
      _
    $region10: #{residual_block_forward.7} parent=5 // pred_check_branch
      %162 = sbr.rel (%p159) target = $region12
    $region11: #{residual_block_forward.7} parent=5 // pred_region
      %s163 = ssub.s32 %s10, 1
      // Predicated region
      $region13: #{residual_block_forward.7} parent=11 // pred_check
        %p164 = pneg %p76
      $region14: #{residual_block_forward.7} parent=11 // pred_check_branch
        %166 = sbr.rel (%p164) target = $region16
      $region15: #{residual_block_forward.7} parent=11 // pred_region
        %s167 = smul.u32 5, %s20
        %p168 = scmp.lt.s32.totalorder %s167, 4
        %s169 = scalar_select %p168, %s167, 4
        %s170 = smul.addr %s169, 4
        %s171 = scalar_lea.vmem %s1, %s170
        %s172 = smul.u32 5, %s20
      $region16: #{residual_block_forward.7} parent=11 // pred_fallthru
        _
      // Predicated region
      $region17: #{residual_block_forward.7} parent=11 // pred_check
        %p173 = pneg %p97
      $region18: #{residual_block_forward.7} parent=11 // pred_check_branch
        %175 = sbr.rel (%p173) target = $region20
      $region19: #{residual_block_forward.7} parent=11 // pred_region
        _
      $region20: #{residual_block_forward.7} parent=11 // pred_fallthru
        _
    $region12: #{residual_block_forward.7} parent=5 // pred_fallthru
      _
    %p176 = scmp.lt.s32.totalorder %s10, 2
    // Predicated region
    $region21: #{residual_block_forward.7} parent=5 // pred_check
      %p177 = pneg %p176
    $region22: #{residual_block_forward.7} parent=5 // pred_check_branch
      %179 = sbr.rel (%p177) target = $region24
    $region23: #{residual_block_forward.7} parent=5 // pred_region
      // Predicated region
      $region25: #{residual_block_forward.7} parent=23 // pred_check
        %p180 = pneg %p44
      $region26: #{residual_block_forward.7} parent=23 // pred_check_branch
        %182 = sbr.rel (%p180) target = $region28
      $region27: #{residual_block_forward.7} parent=23 // pred_region
        %s183 = smul.u32 8, %s17
        %p184 = scmp.lt.s32.totalorder %s183, 15
        %s185 = scalar_select %p184, %s183, 15
        %p186 = scmp.lt.s32.totalorder %s18, 0
        %s187 = scalar_select %p186, %s18, 0
        %s188 = sadd.s32 %s187, %s185
        %s189 = smul.addr %s188, 4
        %s190 = scalar_lea.vmem %s0, %s189
        %s191 = smul.u32 8, %s17
      $region28: #{residual_block_forward.7} parent=23 // pred_fallthru
        _
      // Predicated region
      $region29: #{residual_block_forward.7} parent=23 // pred_check
        %p192 = pneg %p117
      $region30: #{residual_block_forward.7} parent=23 // pred_check_branch
        %194 = sbr.rel (%p192) target = $region32
      $region31: #{residual_block_forward.7} parent=23 // pred_region
        %s195 = smul.u32 8, %s17
        %p196 = scmp.lt.s32.totalorder %s195, 15
        %s197 = scalar_select %p196, %s195, 15
        %s198 = smul.addr %s197, 4
        %s199 = scalar_lea.vmem %s3, %s198
        %s200 = smul.u32 8, %s17
      $region32: #{residual_block_forward.7} parent=23 // pred_fallthru
        _
    $region24: #{residual_block_forward.7} parent=5 // pred_fallthru
      _
    %p201 = scmp.le.s32.totalorder 1, %s10
    %p202 = scmp.lt.s32.totalorder %s10, 3
    %p203 = pnand %p201, %p202
    %p204 = pneg %p203
    // Predicated region
    $region33: #{residual_block_forward.7} parent=5 // pred_check
      _
    $region34: #{residual_block_forward.7} parent=5 // pred_check_branch
      %206 = sbr.rel (%p203) target = $region36
    $region35: #{residual_block_forward.7} parent=5 // pred_region
      %s207 = ssub.s32 %s10, 1
      %s208 = smul.u32 8, %s19
      %p209 = scmp.lt.s32.totalorder %s208, 15
      %s210 = scalar_select %p209, %s208, 15
      %p211 = scmp.lt.s32.totalorder %s20, 0
      %s212 = scalar_select %p211, %s20, 0
      %s213 = sadd.s32 %s212, %s210
      %s214 = smul.addr %s213, 4
      %s215 = scalar_lea.vmem %s0, %s214
      %p216 = pneg %p50
      %p217 = pneg %p47
      %s218 = smul.u32 5, %s20
      %p219 = scmp.lt.s32.totalorder %s218, 4
      %s220 = scalar_select %p219, %s218, 4
      %s221 = smul.addr %s220, 4
      %s222 = scalar_lea.vmem %s1, %s221
      %p223 = pneg %p76
      %p224 = pneg %p73
      %p225 = pneg %p97
      %p226 = pneg %p94
      %s227 = smul.u32 8, %s19
      %p228 = scmp.lt.s32.totalorder %s227, 15
      %s229 = scalar_select %p228, %s227, 15
      %s230 = smul.addr %s229, 4
      %s231 = scalar_lea.vmem %s3, %s230
      %p232 = pneg %p123
      %p233 = pneg %p120
      %p234 = pneg %p149
      %p235 = pneg %p146
      %s236 = smul.u32 8, %s19
      %p237 = scmp.lt.s32.totalorder %s236, 15
      %s238 = scalar_select %p237, %s236, 15
      %s239 = smul.addr %s238, 4
      %s240 = scalar_lea.vmem %s4, %s239
      %s241 = smul.u32 8, %s19
      %p242 = scmp.lt.s32.totalorder %s241, 15
      %s243 = scalar_select %p242, %s241, 15
      %p244 = scmp.lt.s32.totalorder %s20, 0
      %s245 = scalar_select %p244, %s20, 0
      %s246 = sadd.s32 %s245, %s243
      %s247 = smul.addr %s246, 4
      %s248 = scalar_lea.vmem %s0, %s247
      %s249 = smul.u32 8, %s19
      %s250 = smul.u32 5, %s20
      %p251 = scmp.lt.s32.totalorder %s250, 4
      %s252 = scalar_select %p251, %s250, 4
      %s253 = smul.addr %s252, 4
      %s254 = scalar_lea.vmem %s1, %s253
      %s255 = smul.u32 5, %s20
      %s256 = smul.u32 8, %s19
      %p257 = scmp.lt.s32.totalorder %s256, 15
      %s258 = scalar_select %p257, %s256, 15
      %s259 = smul.addr %s258, 4
      %s260 = scalar_lea.vmem %s3, %s259
      %s261 = smul.u32 8, %s19
      %s262 = smul.u32 8, %s19
      %p263 = scmp.lt.s32.totalorder %s262, 15
      %s264 = scalar_select %p263, %s262, 15
      %s265 = smul.addr %s264, 4
      %s266 = scalar_lea.vmem %s4, %s265
      %s267 = smul.u32 8, %s19
      %p269 = scmp.eq.s32.totalorder %s20, 0
      // Predicated region
      $region37: #{residual_block_forward.7} parent=35 // pred_check
        %p270 = pneg %p269
      $region38: #{residual_block_forward.7} parent=35 // pred_check_branch
        %272 = sbr.rel (%p270) target = $region40
      $region39: #{residual_block_forward.7} parent=35 // pred_region
        %273 = vst [vmem:[#allocation2] sm:$0xff] 0.0
        %274 = vst [vmem:[#allocation2 + $0x8] sm:$0xff] 0.0
        %275 = vst [vmem:[#allocation2 + $0x10] sm:$0xff] 0.0
        %276 = vst [vmem:[#allocation2 + $0x18] sm:$0xff] 0.0
        %277 = vst [vmem:[#allocation2 + $0x20] sm:$0xff] 0.0
        %278 = vst [vmem:[#allocation2 + $0x28] sm:$0xff] 0.0
        %279 = vst [vmem:[#allocation2 + $0x30] sm:$0xff] 0.0
        %280 = vst [vmem:[#allocation2 + $0x38] sm:$0xff] 0.0
      $region40: #{residual_block_forward.7} parent=35 // pred_fallthru
        _
      %v281 = vld [vmem:[#allocation2] sm:$0xff]
      %v282 = vld [vmem:[#allocation2 + $0x8] sm:$0xff]
      %v283 = vld [vmem:[#allocation2 + $0x10] sm:$0xff]
      %v284 = vld [vmem:[#allocation2 + $0x18] sm:$0xff]
      %v285 = vld [vmem:[#allocation2 + $0x20] sm:$0xff]
      %v286 = vld [vmem:[#allocation2 + $0x28] sm:$0xff]
      %v287 = vld [vmem:[#allocation2 + $0x30] sm:$0xff]
      %v288 = vld [vmem:[#allocation2 + $0x38] sm:$0xff]
      %v289 = vld [vmem:[%s248] sm:$0xf]
      %v290 = vld [vmem:[%s248 + $0x4] sm:$0xf]
      %v291 = vld [vmem:[%s248 + $0x8] sm:$0xf]
      %v292 = vld [vmem:[%s248 + $0xc] sm:$0xf]
      %v293 = vld [vmem:[%s248 + $0x10] sm:$0xf]
      %v294 = vld [vmem:[%s248 + $0x14] sm:$0xf]
      %v295 = vld [vmem:[%s248 + $0x18] sm:$0xf]
      %v296 = vld [vmem:[%s248 + $0x1c] sm:$0xf]
      %v297 = vld [vmem:[%s254] sm:$0xf]
      %v298 = vld [vmem:[%s254 + $0x4] sm:$0xf]
      %v299 = vld [vmem:[%s254 + $0x8] sm:$0xf]
      %v300 = vld [vmem:[%s254 + $0xc] sm:$0xf]
      %v301 = vld [vmem:[%s254 + $0x10] sm:$0x3]
      %v310 = vunpack.c.l.b16 %v289
      %v311 = vunpack.c.l.b16 %v290
      %v312 = vunpack.c.l.b16 %v291
      %v313 = vunpack.c.l.b16 %v292
      %v314 = vunpack.c.l.b16 %v293
      %v315 = vunpack.c.l.b16 %v294
      %v316 = vunpack.c.l.b16 %v295
      %v317 = vunpack.c.l.b16 %v296
      %v318 = vpack.c.b16 %v311, %v310
      %v319 = vpack.c.b16 %v313, %v312
      %v320 = vpack.c.b16 %v315, %v314
      %v321 = vpack.c.b16 %v317, %v316
      %v327 = vunpack.c.l.b16 %v297
      %v328 = vunpack.c.l.b16 %v298
      %v329 = vunpack.c.l.b16 %v299
      %v330 = vunpack.c.l.b16 %v300
      %v331 = vunpack.c.l.b16 %v301
      %v332 = vpack.c.b16 %v328, %v327
      %v333 = vpack.c.b16 %v330, %v329
      %v334 = vpack.c.b16 %v331, %v331
      %vm337 = vcmask 293888
      %v339 = vsel %vm337, %v318, 0
      %v342 = vsel %vm337, %v319, 0
      %v345 = vsel %vm337, %v320, 0
      %v348 = vsel %vm337, %v321, 0
      %vm350 = vcmask 1041408
      %v352 = vsel %vm350, %v334, 0
      %354 = vmatpush.bf16.msra.mxu0 0
      %355 = vmatpush.bf16.msra.mxu0 0
      %356 = vmatpush.bf16.msra.mxu0 0
      %357 = vmatpush.bf16.msra.mxu0 0
      %358 = vmatpush.bf16.msra.mxu0 0
      %359 = vmatpush.bf16.msra.mxu0 %v352
      %360 = vmatpush.bf16.msra.mxu0 %v333
      %361 = vmatpush.bf16.msra.mxu0 %v332
      %362 = vmatmul.bf16.gmra.mxu0 %v339
      %v363 = vpop.f32.mrf.mxu0
      %v364 = vadd.f32 0.0, %v363
      %v365 = vpop.f32.mrf.mxu0
      %v366 = vadd.f32 0.0, %v365
      %367 = vmatmul.bf16.gmra.mxu0 %v342
      %v368 = vpop.f32.mrf.mxu0
      %v369 = vadd.f32 0.0, %v368
      %v370 = vpop.f32.mrf.mxu0
      %v371 = vadd.f32 0.0, %v370
      %372 = vmatmul.bf16.gmra.mxu0 %v345
      %v373 = vpop.f32.mrf.mxu0
      %v374 = vadd.f32 0.0, %v373
      %v375 = vpop.f32.mrf.mxu0
      %v376 = vadd.f32 0.0, %v375
      %377 = vmatmul.bf16.gmra.mxu0 %v348
      %v378 = vpop.f32.mrf.mxu0
      %v379 = vadd.f32 0.0, %v378
      %v380 = vpop.f32.mrf.mxu0
      %v381 = vadd.f32 0.0, %v380
      %382 = vdwg.mxu0
      %v383 = vadd.f32 %v281, %v364
      %v384 = vadd.f32 %v282, %v366
      %v385 = vadd.f32 %v283, %v369
      %v386 = vadd.f32 %v284, %v371
      %v387 = vadd.f32 %v285, %v374
      %v388 = vadd.f32 %v286, %v376
      %v389 = vadd.f32 %v287, %v379
      %v390 = vadd.f32 %v288, %v381
      %391 = vst [vmem:[#allocation2] sm:$0xff] %v383
      %392 = vst [vmem:[#allocation2 + $0x8] sm:$0xff] %v384
      %393 = vst [vmem:[#allocation2 + $0x10] sm:$0xff] %v385
      %394 = vst [vmem:[#allocation2 + $0x18] sm:$0xff] %v386
      %395 = vst [vmem:[#allocation2 + $0x20] sm:$0xff] %v387
      %396 = vst [vmem:[#allocation2 + $0x28] sm:$0xff] %v388
      %397 = vst [vmem:[#allocation2 + $0x30] sm:$0xff] %v389
      %398 = vst [vmem:[#allocation2 + $0x38] sm:$0xff] %v390
      // Predicated region
      $region41: #{residual_block_forward.7} parent=35 // pred_check
        %p399 = pneg %p269
      $region42: #{residual_block_forward.7} parent=35 // pred_check_branch
        %401 = sbr.rel (%p399) target = $region44
      $region43: #{residual_block_forward.7} parent=35 // pred_region
        %v402 = vld [vmem:[#allocation2] sm:$0xff]
        %v403 = vld [vmem:[#allocation2 + $0x8] sm:$0xff]
        %v404 = vld [vmem:[#allocation2 + $0x10] sm:$0xff]
        %v405 = vld [vmem:[#allocation2 + $0x18] sm:$0xff]
        %v406 = vld [vmem:[#allocation2 + $0x20] sm:$0xff]
        %v407 = vld [vmem:[#allocation2 + $0x28] sm:$0xff]
        %v408 = vld [vmem:[#allocation2 + $0x30] sm:$0xff]
        %v409 = vld [vmem:[#allocation2 + $0x38] sm:$0xff]
        %v410 = vld [vmem:[%s2] sm:$0x1]
        %v412 = vperm.slane %v410, 0
        %v414 = vadd.f32 %v402, %v412
        %v415 = vadd.f32 %v403, %v412
        %v416 = vadd.f32 %v404, %v412
        %v417 = vadd.f32 %v405, %v412
        %v418 = vadd.f32 %v406, %v412
        %v419 = vadd.f32 %v407, %v412
        %v420 = vadd.f32 %v408, %v412
        %v421 = vadd.f32 %v409, %v412
        %vm422 = vcmp.ge.f32.partialorder %v414, 0.0
        %vm423 = vcmp.ge.f32.partialorder %v415, 0.0
        %vm424 = vcmp.ge.f32.partialorder %v416, 0.0
        %vm425 = vcmp.ge.f32.partialorder %v417, 0.0
        %vm426 = vcmp.ge.f32.partialorder %v418, 0.0
        %vm427 = vcmp.ge.f32.partialorder %v419, 0.0
        %vm428 = vcmp.ge.f32.partialorder %v420, 0.0
        %vm429 = vcmp.ge.f32.partialorder %v421, 0.0
        %v430 = vmul.f32 %v414, 0.1
        %v431 = vmul.f32 %v415, 0.1
        %v432 = vmul.f32 %v416, 0.1
        %v433 = vmul.f32 %v417, 0.1
        %v434 = vmul.f32 %v418, 0.1
        %v435 = vmul.f32 %v419, 0.1
        %v436 = vmul.f32 %v420, 0.1
        %v437 = vmul.f32 %v421, 0.1
        %v438 = vsel %vm422, %v414, %v430
        %v439 = vsel %vm423, %v415, %v431
        %v440 = vsel %vm424, %v416, %v432
        %v441 = vsel %vm425, %v417, %v433
        %v442 = vsel %vm426, %v418, %v434
        %v443 = vsel %vm427, %v419, %v435
        %v444 = vsel %vm428, %v420, %v436
        %v445 = vsel %vm429, %v421, %v437
        %v446 = vld [vmem:[%s260] sm:$0xf]
        %v447 = vld [vmem:[%s260 + $0x4] sm:$0xf]
        %v448 = vld [vmem:[%s260 + $0x8] sm:$0xf]
        %v449 = vld [vmem:[%s260 + $0xc] sm:$0xf]
        %v450 = vld [vmem:[%s260 + $0x10] sm:$0xf]
        %v451 = vld [vmem:[%s260 + $0x14] sm:$0xf]
        %v452 = vld [vmem:[%s260 + $0x18] sm:$0xf]
        %v453 = vld [vmem:[%s260 + $0x1c] sm:$0xf]
        %v454 = vunpack.c.l.bf16 %v446
        %v455 = vunpack.c.l.bf16 %v447
        %v456 = vunpack.c.l.bf16 %v448
        %v457 = vunpack.c.l.bf16 %v449
        %v458 = vunpack.c.l.bf16 %v450
        %v459 = vunpack.c.l.bf16 %v451
        %v460 = vunpack.c.l.bf16 %v452
        %v461 = vunpack.c.l.bf16 %v453
        %v462 = vadd.f32 %v438, %v454
        %v463 = vadd.f32 %v439, %v455
        %v464 = vadd.f32 %v440, %v456
        %v465 = vadd.f32 %v441, %v457
        %v466 = vadd.f32 %v442, %v458
        %v467 = vadd.f32 %v443, %v459
        %v468 = vadd.f32 %v444, %v460
        %v469 = vadd.f32 %v445, %v461
        %v470 = vpack.c.bf16 %v462, %v462
        %v471 = vpack.c.bf16 %v463, %v463
        %v472 = vpack.c.bf16 %v464, %v464
        %v473 = vpack.c.bf16 %v465, %v465
        %v474 = vpack.c.bf16 %v466, %v466
        %v475 = vpack.c.bf16 %v467, %v467
        %v476 = vpack.c.bf16 %v468, %v468
        %v477 = vpack.c.bf16 %v469, %v469
        %478 = vst [vmem:[%s266] sm:$0xf] %v470
        %479 = vst [vmem:[%s266 + $0x4] sm:$0xf] %v471
        %480 = vst [vmem:[%s266 + $0x8] sm:$0xf] %v472
        %481 = vst [vmem:[%s266 + $0xc] sm:$0xf] %v473
        %482 = vst [vmem:[%s266 + $0x10] sm:$0xf] %v474
        %483 = vst [vmem:[%s266 + $0x14] sm:$0xf] %v475
        %484 = vst [vmem:[%s266 + $0x18] sm:$0xf] %v476
        %485 = vst [vmem:[%s266 + $0x1c] sm:$0xf] %v477
      $region44: #{residual_block_forward.7} parent=35 // pred_fallthru
        _
      %s486 = smul.u32 8, %s19
      %p487 = scmp.lt.s32.totalorder %s486, 15
      %s488 = scalar_select %p487, %s486, 15
      %s489 = smul.addr %s488, 4
      %s490 = scalar_lea.vmem %s4, %s489
      // Predicated region
      $region45: #{residual_block_forward.7} parent=35 // pred_check
        %p491 = pneg %p146
      $region46: #{residual_block_forward.7} parent=35 // pred_check_branch
        %493 = sbr.rel (%p491) target = $region48
      $region47: #{residual_block_forward.7} parent=35 // pred_region
        %s494 = smul.u32 8, %s19
      $region48: #{residual_block_forward.7} parent=35 // pred_fallthru
        _
    $region36: #{residual_block_forward.7} parent=5 // pred_fallthru
      _
    %p495 = scmp.le.s32.totalorder 2, %s10
    // Predicated region
    $region49: #{residual_block_forward.7} parent=5 // pred_check
      %p496 = pneg %p495
    $region50: #{residual_block_forward.7} parent=5 // pred_check_branch
      %498 = sbr.rel (%p496) target = $region52
    $region51: #{residual_block_forward.7} parent=5 // pred_region
      %s499 = ssub.s32 %s10, 2
      // Predicated region
      $region53: #{residual_block_forward.7} parent=51 // pred_check
        %p500 = pneg %p152
      $region54: #{residual_block_forward.7} parent=51 // pred_check_branch
        %502 = sbr.rel (%p500) target = $region56
      $region55: #{residual_block_forward.7} parent=51 // pred_region
        %s503 = smul.u32 8, %s21
        %p504 = scmp.lt.s32.totalorder %s503, 15
        %s505 = scalar_select %p504, %s503, 15
        %s506 = smul.addr %s505, 4
        %s507 = scalar_lea.vmem %s4, %s506
      $region56: #{residual_block_forward.7} parent=51 // pred_fallthru
        _
    $region52: #{residual_block_forward.7} parent=5 // pred_fallthru
      _
  $region6: #{residual_block_forward.7} parent=0 // loop_footer
    %s14 = sadd.s32 1, %s10
  $region7: #{residual_block_forward.7} parent=0 // loop_footer_branch
    %9 = sbr.rel target = $region3
  $region8: #{residual_block_forward.7} parent=0 // loop_exit
    _

</llo_original>
